<compile_context>
chip_gen: v7x
topology: tpu7x:2x2x1
jax: 0.10.0
libtpu: 0.0.40
codegen_flags: <defaults>
</compile_context>

<pallas_src>
import functools

import jax
import jax.numpy as jnp
from jax.experimental import pallas as pl
from jax.experimental.pallas import tpu as pltpu


K_HOPS = 3           # TAGConv K
OUT_LANES = 128      # lane-dense head output width (column 0 = real logit)
ROW_LIN_W = 8        # sublane-aligned row offset of lin1/lin2 weights in the slab
LIN2_COL = 128       # lane-aligned column offset of the lin2 (padded) region

_VMEM = pl.BlockSpec(memory_space=pltpu.MemorySpace.VMEM)


# ---------------------------------------------------------------------------
# Fused Pallas kernel: 5 x TAGConv(+ReLU) -> mean-pool -> dropout -> MLP head
# ---------------------------------------------------------------------------

def tagnn_fused_kernel(a_ref, x_ref, convw_ref, pslab_ref, pm_ref, o_ref,
                       hops_ref, *, K, H, compute_dtype):
    """Whole-array VMEM blocks.

    a_ref:     [N, N]            bf16  normalized dense adjacency (target x source)
    x_ref:     [N, H]            bf16  node features, zero-padded F -> H
    convw_ref: [5, (K+1)*H, H]   bf16  stacked per-hop conv weights (hop-major)
    pslab_ref: [8+H+1, 256]      f32   rows 0..4: conv biases (cols 0..H-1)
                                       rows 8..8+H-1: lin1_w | lin2_pad (col 128+)
                                       row 8+H:       lin1_b | lin2_b_pad
    pm_ref:    [G, N+H]          f32   mean-pool matrix | dropout mask (1/(1-p) scaled)
    o_ref:     [G, 128]          f32   lane-dense output; column 0 = sigmoid logit
    hops_ref:  [N, (K+1)*H]      bf16  persistent scratch slab for the hop chain
    """
    a = a_ref[...]                                    # bf16 [N, N]
    h_bf = x_ref[...]                                 # bf16 [N, H]

    ps = pslab_ref[...]                               # f32 [8+H+1, 256]
    conv_b = ps[0:5, 0:H]                             # [5, H]
    lw1 = ps[ROW_LIN_W:ROW_LIN_W + H, 0:H]            # [H, H]
    lw2 = ps[ROW_LIN_W:ROW_LIN_W + H, LIN2_COL:]      # [H, 128]
    lb1 = ps[ROW_LIN_W + H:ROW_LIN_W + H + 1, 0:H]    # [1, H]
    lb2 = ps[ROW_LIN_W + H:ROW_LIN_W + H + 1, LIN2_COL:]  # [1, 128]

    h_f32 = None
    for layer in range(5):
        w = convw_ref[layer]                          # bf16 [(K+1)*H, H]
        b = conv_b[layer:layer + 1, :]                # f32  [1, H]

        # Hop chain: bf16 MXU operands, f32 accumulation; each hop is cast to
        # bf16 once and written at a static lane offset into the scratch slab.
        hops_ref[:, 0:H] = h_bf
        xk = h_bf
        for k in range(1, K + 1):
            xk = jnp.dot(a, xk,
                         preferred_element_type=jnp.float32).astype(compute_dtype)
            hops_ref[:, k * H:(k + 1) * H] = xk

        # ONE stacked 128-deep matmul per layer instead of K+1 tiny ones.
        h_f32 = jnp.maximum(
            jnp.dot(hops_ref[...], w, preferred_element_type=jnp.float32) + b,
            0.0)
        h_bf = h_f32.astype(compute_dtype)

    # global_mean_pool -> dropout -> lin1 -> lin2 -> sigmoid  (all f32, tiny)
    pm = pm_ref[...]                                  # f32 [G, N+H]
    n = pm.shape[1] - H
    pool = pm[:, :n]
    mask = pm[:, n:]
    pooled = jnp.dot(pool, h_f32, preferred_element_type=jnp.float32) * mask
    z = jnp.dot(pooled, lw1, preferred_element_type=jnp.float32) + lb1
    y = jnp.dot(z, lw2, preferred_element_type=jnp.float32) + lb2
    o_ref[...] = jax.nn.sigmoid(y)                    # [G, 128] lane-dense store


# ---------------------------------------------------------------------------
# Glue: graph densification, parameter init / one-time packing, forward
# ---------------------------------------------------------------------------

def build_norm_adj(edge_index, edge_weight, num_nodes):
    """gcn_norm (add_self_loops=False, as in TAGConv) -> dense [N, N]."""
    row, col = edge_index[0], edge_index[1]           # source, target
    deg = jnp.zeros((num_nodes,), jnp.float32).at[col].add(edge_weight)
    safe = jnp.where(deg > 0, deg, 1.0)
    dinv = jnp.where(deg > 0, 1.0 / jnp.sqrt(safe), 0.0)
    norm = dinv[row] * edge_weight * dinv[col]
    # propagate: out[target] += norm * x[source]  =>  A[target, source] = norm
    a = jnp.zeros((num_nodes, num_nodes), jnp.float32).at[col, row].add(norm)
    return a


def build_pool_matrix(batch, num_graphs):
    onehot = (batch[None, :] == jnp.arange(num_graphs)[:, None]).astype(jnp.float32)
    counts = jnp.maximum(onehot.sum(axis=1, keepdims=True), 1.0)
    return onehot / counts                            # [G, N]


def init_params(key, num_node_features, hidden, K=K_HOPS):
    params = {}
    dims = [(num_node_features, hidden)] + [(hidden, hidden)] * 4
    for i, (cin, cout) in enumerate(dims):
        key, kw, kb = jax.random.split(key, 3)
        params[f"conv{i+1}_w"] = 0.1 * jax.random.normal(kw, (K + 1, cin, cout),
                                                         jnp.float32)
        params[f"conv{i+1}_b"] = 0.1 * jax.random.normal(kb, (cout,), jnp.float32)
    key, k1, k2, k3, k4 = jax.random.split(key, 5)
    params["lin1_w"] = 0.1 * jax.random.normal(k1, (hidden, hidden), jnp.float32)
    params["lin1_b"] = 0.1 * jax.random.normal(k2, (hidden,), jnp.float32)
    params["lin2_w"] = 0.1 * jax.random.normal(k3, (hidden, 1), jnp.float32)
    params["lin2_b"] = 0.1 * jax.random.normal(k4, (1,), jnp.float32)
    return params


def pack_params(params, hidden, K=K_HOPS):
    """One-time packing of all 14 parameter tensors into 2 slabs (hoisted out
    of the per-call hot path)."""
    H = hidden
    assert H <= LIN2_COL, "param-slab layout assumes hidden <= 128"

    # Stack all 5 conv weights as [(K+1)*H, H] hop-major blocks; conv1's Cin
    # (=F) is zero-padded to H so every layer uses the same 128-deep layout.
    ws = []
    for i in range(1, 6):
        w = params[f"conv{i}_w"]                      # [K+1, cin, H]
        cin = w.shape[1]
        if cin < H:
            w = jnp.pad(w, ((0, 0), (0, H - cin), (0, 0)))
        ws.append(w.reshape((K + 1) * H, H))
    conv_w = jnp.stack(ws).astype(jnp.bfloat16)       # bf16 [5, (K+1)*H, H]

    # f32 param slab with sublane/lane aligned sub-regions.
    slab = jnp.zeros((ROW_LIN_W + H + 1, LIN2_COL + OUT_LANES), jnp.float32)
    for i in range(5):
        slab = slab.at[i, :H].set(params[f"conv{i+1}_b"])
    slab = slab.at[ROW_LIN_W:ROW_LIN_W + H, :H].set(params["lin1_w"])
    slab = slab.at[ROW_LIN_W:ROW_LIN_W + H, LIN2_COL:LIN2_COL + 1].set(params["lin2_w"])
    slab = slab.at[ROW_LIN_W + H, :H].set(params["lin1_b"])
    slab = slab.at[ROW_LIN_W + H, LIN2_COL:LIN2_COL + 1].set(params["lin2_b"])

    return {"conv_w": conv_w, "param_slab": slab, "hidden": H}


def tagnn_forward(packed, x, edge_index, edge_weight, batch, num_graphs,
                  dropout_p=0.1, dropout_key=None):
    n, f = x.shape
    H = packed["hidden"]
    conv_w = packed["conv_w"]
    slab = packed["param_slab"]

    # Dense normalized adjacency (bf16 MXU operand).
    # TODO(synk): for large N quantize A to int8 (v5e/v6e) / fp8 (v7x) with a
    # per-row scale -- entries are <= 1 after gcn_norm.
    a = build_norm_adj(edge_index, edge_weight, n).astype(jnp.bfloat16)

    # Pad features F -> H and cast to bf16 once (layer 1 shares the stacked layout).
    x_pad = jnp.zeros((n, H), jnp.float32).at[:, :f].set(x).astype(jnp.bfloat16)

    pool_mat = build_pool_matrix(batch, num_graphs)
    # F.dropout defaults to training=True in the reference; mask drawn here
    # (JAX RNG -- cannot bit-match torch's RNG stream), applied in-kernel.
    if dropout_key is not None and dropout_p > 0.0:
        keep = jax.random.bernoulli(dropout_key, 1.0 - dropout_p, (num_graphs, H))
        drop_mask = keep.astype(jnp.float32) / (1.0 - dropout_p)
    else:
        drop_mask = jnp.ones((num_graphs, H), jnp.float32)
    # Pool matrix + dropout mask packed into one slab -> one DMA instead of two.
    pm = jnp.concatenate([pool_mat, drop_mask], axis=1)          # [G, N+H]

    hop_slab_bytes = n * (K_HOPS + 1) * H * 2
    io_bytes = (a.size * a.dtype.itemsize + x_pad.size * x_pad.dtype.itemsize
                + conv_w.size * conv_w.dtype.itemsize
                + slab.size * slab.dtype.itemsize + pm.size * pm.dtype.itemsize
                + num_graphs * OUT_LANES * 4)
    resident_bytes = io_bytes + hop_slab_bytes

    # Whole-in-VMEM single-core design; keep ~2x headroom under v7x's 64 MiB.
    # TODO(synk): row-tiled grid over target nodes (dimension_semantics=
    # ("parallel",...)) for larger N / both v7x TensorCores, plus RHS widening
    # (block-diagonal multi-graph batching) to fill the MXU output lanes.
    assert resident_bytes * 2 < 48 * 2 ** 20, (
        "working set too large for the whole-in-VMEM kernel; add the row-tiled grid")

    flops = int(5 * K_HOPS * 2 * n * n * H             # hop chain A @ Xk
                + 5 * 2 * n * (K_HOPS + 1) * H * H     # stacked hop matmul
                + 2 * num_graphs * n * H               # mean pool
                + 2 * num_graphs * H * H               # lin1
                + 2 * num_graphs * H * OUT_LANES)      # lin2 (lane-padded)
    cost = pl.CostEstimate(flops=flops,
                           transcendentals=int(num_graphs * OUT_LANES),
                           bytes_accessed=int(io_bytes))

    out_padded = pl.pallas_call(
        functools.partial(tagnn_fused_kernel, K=K_HOPS, H=H,
                          compute_dtype=jnp.bfloat16),
        out_shape=jax.ShapeDtypeStruct((num_graphs, OUT_LANES), jnp.float32),
        in_specs=[_VMEM] * 5,
        out_specs=_VMEM,
        scratch_shapes=[pltpu.VMEM((n, (K_HOPS + 1) * H), jnp.bfloat16)],
        compiler_params=pltpu.CompilerParams(
            vmem_limit_bytes=int(min(100 * 2 ** 20,
                                     max(4 * 2 ** 20, 4 * resident_bytes)))),
        cost_estimate=cost,
    )(a, x_pad, conv_w, slab, pm)

    return out_padded[:, :1]                           # [G, 1]


# ---------------------------------------------------------------------------
# Main
# ---------------------------------------------------------------------------

if __name__ == "__main__":
    NUM_NODE_FEATURES = 8
    HIDDEN = 32
    N_NODES = 16
    N_EDGES = 48
    N_GRAPHS = 2

    root = jax.random.PRNGKey(0)
    k_x, k_src, k_dst, k_w, k_params, k_drop = jax.random.split(root, 6)

    x = jax.random.normal(k_x, (N_NODES, NUM_NODE_FEATURES), jnp.float32)
    src = jax.random.randint(k_src, (N_EDGES,), 0, N_NODES)
    dst = jax.random.randint(k_dst, (N_EDGES,), 0, N_NODES)
    edge_index = jnp.stack([src, dst]).astype(jnp.int32)           # [2, E]
    edge_weight = jax.random.uniform(k_w, (N_EDGES,), jnp.float32, 0.5, 1.5)
    batch = jnp.concatenate([jnp.zeros(N_NODES // 2, jnp.int32),
                             jnp.ones(N_NODES - N_NODES // 2, jnp.int32)])

    params = init_params(k_params, NUM_NODE_FEATURES, HIDDEN, K=K_HOPS)
    packed = pack_params(params, HIDDEN, K=K_HOPS)     # one-time packing (hoisted)

    out = tagnn_forward(packed, x, edge_index, edge_weight, batch, N_GRAPHS,
                        dropout_p=0.1, dropout_key=k_drop)
    out = jax.block_until_ready(out)

    assert out.shape == (N_GRAPHS, 1)
    assert bool(jnp.all(jnp.isfinite(out)))
    assert bool(jnp.all((out >= 0.0) & (out <= 1.0)))
    print("KERNEL_OK")
</pallas_src>

<mosaic_0001>
module attributes {stable_mosaic.version = 11 : i64} {
  func.func @tagnn_fused_kernel(%arg0: memref<16x16xbf16, #tpu.memory_space<vmem>>, %arg1: memref<16x32xbf16, #tpu.memory_space<vmem>>, %arg2: memref<5x128x32xbf16, #tpu.memory_space<vmem>>, %arg3: memref<41x256xf32, #tpu.memory_space<vmem>>, %arg4: memref<2x48xf32, #tpu.memory_space<vmem>>, %arg5: memref<2x128xf32, #tpu.memory_space<vmem>>, %arg6: memref<16x128xbf16, #tpu.memory_space<vmem>>) attributes {dimension_semantics = [], scalar_prefetch = 0 : i64, scratch_operands = 1 : i64, tpu.core_type = #tpu.core_type<tc>} {
    %c0 = arith.constant 0 : index
    %c0_0 = arith.constant 0 : index
    %0 = vector.load %arg0[%c0, %c0_0] : memref<16x16xbf16, #tpu.memory_space<vmem>>, vector<16x16xbf16>
    %c0_1 = arith.constant 0 : index
    %c0_2 = arith.constant 0 : index
    %1 = vector.load %arg1[%c0_1, %c0_2] : memref<16x32xbf16, #tpu.memory_space<vmem>>, vector<16x32xbf16>
    %c0_3 = arith.constant 0 : index
    %c0_4 = arith.constant 0 : index
    %2 = vector.load %arg3[%c0_3, %c0_4] : memref<41x256xf32, #tpu.memory_space<vmem>>, vector<41x256xf32>
    %3 = vector.extract_strided_slice %2 {offsets = [0, 0], sizes = [5, 32], strides = [1, 1]} : vector<41x256xf32> to vector<5x32xf32>
    %4 = vector.extract_strided_slice %2 {offsets = [8, 0], sizes = [32, 32], strides = [1, 1]} : vector<41x256xf32> to vector<32x32xf32>
    %5 = vector.extract_strided_slice %2 {offsets = [8, 128], sizes = [32, 128], strides = [1, 1]} : vector<41x256xf32> to vector<32x128xf32>
    %6 = vector.extract_strided_slice %2 {offsets = [40, 0], sizes = [1, 32], strides = [1, 1]} : vector<41x256xf32> to vector<1x32xf32>
    %7 = vector.extract_strided_slice %2 {offsets = [40, 128], sizes = [1, 128], strides = [1, 1]} : vector<41x256xf32> to vector<1x128xf32>
    %c0_5 = arith.constant 0 : index
    %c0_6 = arith.constant 0 : index
    %c0_7 = arith.constant 0 : index
    %8 = vector.load %arg2[%c0_5, %c0_6, %c0_7] : memref<5x128x32xbf16, #tpu.memory_space<vmem>>, vector<1x128x32xbf16>
    %9 = vector.shape_cast %8 : vector<1x128x32xbf16> to vector<128x32xbf16>
    %10 = vector.extract_strided_slice %3 {offsets = [0, 0], sizes = [1, 32], strides = [1, 1]} : vector<5x32xf32> to vector<1x32xf32>
    %c0_8 = arith.constant 0 : index
    %c0_9 = arith.constant 0 : index
    %11 = vector.load %arg6[%c0_8, %c0_9] : memref<16x128xbf16, #tpu.memory_space<vmem>>, vector<16x32xbf16>
    tpu.vector_store %arg6[%c0_8, %c0_9], %1 {strides = array<i32>} : memref<16x128xbf16, #tpu.memory_space<vmem>>, vector<16x32xbf16>,
    %cst = arith.constant dense<0.000000e+00> : vector<16x32xf32>
    %12 = tpu.matmul %0, %1, %cst {dimension_numbers = #tpu.dot_dimension_numbers<[1], [0], [0], [1], [0, 0, 1, 1], [], []>} : vector<16x16xbf16>, vector<16x32xbf16>, vector<16x32xf32> -> vector<16x32xf32>
    %13 = arith.truncf %12 : vector<16x32xf32> to vector<16x32xbf16>
    %c0_10 = arith.constant 0 : index
    %c32 = arith.constant 32 : index
    %14 = vector.load %arg6[%c0_10, %c32] : memref<16x128xbf16, #tpu.memory_space<vmem>>, vector<16x32xbf16>
    tpu.vector_store %arg6[%c0_10, %c32], %13 {strides = array<i32>} : memref<16x128xbf16, #tpu.memory_space<vmem>>, vector<16x32xbf16>,
    %cst_11 = arith.constant dense<0.000000e+00> : vector<16x32xf32>
    %15 = tpu.matmul %0, %13, %cst_11 {dimension_numbers = #tpu.dot_dimension_numbers<[1], [0], [0], [1], [0, 0, 1, 1], [], []>} : vector<16x16xbf16>, vector<16x32xbf16>, vector<16x32xf32> -> vector<16x32xf32>
    %16 = arith.truncf %15 : vector<16x32xf32> to vector<16x32xbf16>
    %c0_12 = arith.constant 0 : index
    %c64 = arith.constant 64 : index
    %17 = vector.load %arg6[%c0_12, %c64] : memref<16x128xbf16, #tpu.memory_space<vmem>>, vector<16x32xbf16>
    tpu.vector_store %arg6[%c0_12, %c64], %16 {strides = array<i32>} : memref<16x128xbf16, #tpu.memory_space<vmem>>, vector<16x32xbf16>,
    %cst_13 = arith.constant dense<0.000000e+00> : vector<16x32xf32>
    %18 = tpu.matmul %0, %16, %cst_13 {dimension_numbers = #tpu.dot_dimension_numbers<[1], [0], [0], [1], [0, 0, 1, 1], [], []>} : vector<16x16xbf16>, vector<16x32xbf16>, vector<16x32xf32> -> vector<16x32xf32>
    %19 = arith.truncf %18 : vector<16x32xf32> to vector<16x32xbf16>
    %c0_14 = arith.constant 0 : index
    %c96 = arith.constant 96 : index
    %20 = vector.load %arg6[%c0_14, %c96] : memref<16x128xbf16, #tpu.memory_space<vmem>>, vector<16x32xbf16>
    tpu.vector_store %arg6[%c0_14, %c96], %19 {strides = array<i32>} : memref<16x128xbf16, #tpu.memory_space<vmem>>, vector<16x32xbf16>,
    %c0_15 = arith.constant 0 : index
    %c0_16 = arith.constant 0 : index
    %21 = vector.load %arg6[%c0_15, %c0_16] : memref<16x128xbf16, #tpu.memory_space<vmem>>, vector<16x128xbf16>
    %cst_17 = arith.constant dense<0.000000e+00> : vector<16x32xf32>
    %22 = tpu.matmul %21, %9, %cst_17 {dimension_numbers = #tpu.dot_dimension_numbers<[1], [0], [0], [1], [0, 0, 1, 1], [], []>} : vector<16x128xbf16>, vector<128x32xbf16>, vector<16x32xf32> -> vector<16x32xf32>
    %23 = vector.broadcast %10 : vector<1x32xf32> to vector<16x32xf32>
    %24 = arith.addf %22, %23 : vector<16x32xf32>
    %cst_18 = arith.constant 0.000000e+00 : f32
    %25 = vector.broadcast %cst_18 : f32 to vector<16x32xf32>
    %26 = arith.maximumf %24, %25 : vector<16x32xf32>
    %27 = arith.truncf %26 : vector<16x32xf32> to vector<16x32xbf16>
    %c1 = arith.constant 1 : index
    %c0_19 = arith.constant 0 : index
    %c0_20 = arith.constant 0 : index
    %28 = vector.load %arg2[%c1, %c0_19, %c0_20] : memref<5x128x32xbf16, #tpu.memory_space<vmem>>, vector<1x128x32xbf16>
    %29 = vector.shape_cast %28 : vector<1x128x32xbf16> to vector<128x32xbf16>
    %30 = vector.extract_strided_slice %3 {offsets = [1, 0], sizes = [1, 32], strides = [1, 1]} : vector<5x32xf32> to vector<1x32xf32>
    %c0_21 = arith.constant 0 : index
    %c0_22 = arith.constant 0 : index
    %31 = vector.load %arg6[%c0_21, %c0_22] : memref<16x128xbf16, #tpu.memory_space<vmem>>, vector<16x32xbf16>
    tpu.vector_store %arg6[%c0_21, %c0_22], %27 {strides = array<i32>} : memref<16x128xbf16, #tpu.memory_space<vmem>>, vector<16x32xbf16>,
    %cst_23 = arith.constant dense<0.000000e+00> : vector<16x32xf32>
    %32 = tpu.matmul %0, %27, %cst_23 {dimension_numbers = #tpu.dot_dimension_numbers<[1], [0], [0], [1], [0, 0, 1, 1], [], []>} : vector<16x16xbf16>, vector<16x32xbf16>, vector<16x32xf32> -> vector<16x32xf32>
    %33 = arith.truncf %32 : vector<16x32xf32> to vector<16x32xbf16>
    %c0_24 = arith.constant 0 : index
    %c32_25 = arith.constant 32 : index
    %34 = vector.load %arg6[%c0_24, %c32_25] : memref<16x128xbf16, #tpu.memory_space<vmem>>, vector<16x32xbf16>
    tpu.vector_store %arg6[%c0_24, %c32_25], %33 {strides = array<i32>} : memref<16x128xbf16, #tpu.memory_space<vmem>>, vector<16x32xbf16>,
    %cst_26 = arith.constant dense<0.000000e+00> : vector<16x32xf32>
    %35 = tpu.matmul %0, %33, %cst_26 {dimension_numbers = #tpu.dot_dimension_numbers<[1], [0], [0], [1], [0, 0, 1, 1], [], []>} : vector<16x16xbf16>, vector<16x32xbf16>, vector<16x32xf32> -> vector<16x32xf32>
    %36 = arith.truncf %35 : vector<16x32xf32> to vector<16x32xbf16>
    %c0_27 = arith.constant 0 : index
    %c64_28 = arith.constant 64 : index
    %37 = vector.load %arg6[%c0_27, %c64_28] : memref<16x128xbf16, #tpu.memory_space<vmem>>, vector<16x32xbf16>
    tpu.vector_store %arg6[%c0_27, %c64_28], %36 {strides = array<i32>} : memref<16x128xbf16, #tpu.memory_space<vmem>>, vector<16x32xbf16>,
    %cst_29 = arith.constant dense<0.000000e+00> : vector<16x32xf32>
    %38 = tpu.matmul %0, %36, %cst_29 {dimension_numbers = #tpu.dot_dimension_numbers<[1], [0], [0], [1], [0, 0, 1, 1], [], []>} : vector<16x16xbf16>, vector<16x32xbf16>, vector<16x32xf32> -> vector<16x32xf32>
    %39 = arith.truncf %38 : vector<16x32xf32> to vector<16x32xbf16>
    %c0_30 = arith.constant 0 : index
    %c96_31 = arith.constant 96 : index
    %40 = vector.load %arg6[%c0_30, %c96_31] : memref<16x128xbf16, #tpu.memory_space<vmem>>, vector<16x32xbf16>
    tpu.vector_store %arg6[%c0_30, %c96_31], %39 {strides = array<i32>} : memref<16x128xbf16, #tpu.memory_space<vmem>>, vector<16x32xbf16>,
    %c0_32 = arith.constant 0 : index
    %c0_33 = arith.constant 0 : index
    %41 = vector.load %arg6[%c0_32, %c0_33] : memref<16x128xbf16, #tpu.memory_space<vmem>>, vector<16x128xbf16>
    %cst_34 = arith.constant dense<0.000000e+00> : vector<16x32xf32>
    %42 = tpu.matmul %41, %29, %cst_34 {dimension_numbers = #tpu.dot_dimension_numbers<[1], [0], [0], [1], [0, 0, 1, 1], [], []>} : vector<16x128xbf16>, vector<128x32xbf16>, vector<16x32xf32> -> vector<16x32xf32>
    %43 = vector.broadcast %30 : vector<1x32xf32> to vector<16x32xf32>
    %44 = arith.addf %42, %43 : vector<16x32xf32>
    %cst_35 = arith.constant 0.000000e+00 : f32
    %45 = vector.broadcast %cst_35 : f32 to vector<16x32xf32>
    %46 = arith.maximumf %44, %45 : vector<16x32xf32>
    %47 = arith.truncf %46 : vector<16x32xf32> to vector<16x32xbf16>
    %c2 = arith.constant 2 : index
    %c0_36 = arith.constant 0 : index
    %c0_37 = arith.constant 0 : index
    %48 = vector.load %arg2[%c2, %c0_36, %c0_37] : memref<5x128x32xbf16, #tpu.memory_space<vmem>>, vector<1x128x32xbf16>
    %49 = vector.shape_cast %48 : vector<1x128x32xbf16> to vector<128x32xbf16>
    %50 = vector.extract_strided_slice %3 {offsets = [2, 0], sizes = [1, 32], strides = [1, 1]} : vector<5x32xf32> to vector<1x32xf32>
    %c0_38 = arith.constant 0 : index
    %c0_39 = arith.constant 0 : index
    %51 = vector.load %arg6[%c0_38, %c0_39] : memref<16x128xbf16, #tpu.memory_space<vmem>>, vector<16x32xbf16>
    tpu.vector_store %arg6[%c0_38, %c0_39], %47 {strides = array<i32>} : memref<16x128xbf16, #tpu.memory_space<vmem>>, vector<16x32xbf16>,
    %cst_40 = arith.constant dense<0.000000e+00> : vector<16x32xf32>
    %52 = tpu.matmul %0, %47, %cst_40 {dimension_numbers = #tpu.dot_dimension_numbers<[1], [0], [0], [1], [0, 0, 1, 1], [], []>} : vector<16x16xbf16>, vector<16x32xbf16>, vector<16x32xf32> -> vector<16x32xf32>
    %53 = arith.truncf %52 : vector<16x32xf32> to vector<16x32xbf16>
    %c0_41 = arith.constant 0 : index
    %c32_42 = arith.constant 32 : index
    %54 = vector.load %arg6[%c0_41, %c32_42] : memref<16x128xbf16, #tpu.memory_space<vmem>>, vector<16x32xbf16>
    tpu.vector_store %arg6[%c0_41, %c32_42], %53 {strides = array<i32>} : memref<16x128xbf16, #tpu.memory_space<vmem>>, vector<16x32xbf16>,
    %cst_43 = arith.constant dense<0.000000e+00> : vector<16x32xf32>
    %55 = tpu.matmul %0, %53, %cst_43 {dimension_numbers = #tpu.dot_dimension_numbers<[1], [0], [0], [1], [0, 0, 1, 1], [], []>} : vector<16x16xbf16>, vector<16x32xbf16>, vector<16x32xf32> -> vector<16x32xf32>
    %56 = arith.truncf %55 : vector<16x32xf32> to vector<16x32xbf16>
    %c0_44 = arith.constant 0 : index
    %c64_45 = arith.constant 64 : index
    %57 = vector.load %arg6[%c0_44, %c64_45] : memref<16x128xbf16, #tpu.memory_space<vmem>>, vector<16x32xbf16>
    tpu.vector_store %arg6[%c0_44, %c64_45], %56 {strides = array<i32>} : memref<16x128xbf16, #tpu.memory_space<vmem>>, vector<16x32xbf16>,
    %cst_46 = arith.constant dense<0.000000e+00> : vector<16x32xf32>
    %58 = tpu.matmul %0, %56, %cst_46 {dimension_numbers = #tpu.dot_dimension_numbers<[1], [0], [0], [1], [0, 0, 1, 1], [], []>} : vector<16x16xbf16>, vector<16x32xbf16>, vector<16x32xf32> -> vector<16x32xf32>
    %59 = arith.truncf %58 : vector<16x32xf32> to vector<16x32xbf16>
    %c0_47 = arith.constant 0 : index
    %c96_48 = arith.constant 96 : index
    %60 = vector.load %arg6[%c0_47, %c96_48] : memref<16x128xbf16, #tpu.memory_space<vmem>>, vector<16x32xbf16>
    tpu.vector_store %arg6[%c0_47, %c96_48], %59 {strides = array<i32>} : memref<16x128xbf16, #tpu.memory_space<vmem>>, vector<16x32xbf16>,
    %c0_49 = arith.constant 0 : index
    %c0_50 = arith.constant 0 : index
    %61 = vector.load %arg6[%c0_49, %c0_50] : memref<16x128xbf16, #tpu.memory_space<vmem>>, vector<16x128xbf16>
    %cst_51 = arith.constant dense<0.000000e+00> : vector<16x32xf32>
    %62 = tpu.matmul %61, %49, %cst_51 {dimension_numbers = #tpu.dot_dimension_numbers<[1], [0], [0], [1], [0, 0, 1, 1], [], []>} : vector<16x128xbf16>, vector<128x32xbf16>, vector<16x32xf32> -> vector<16x32xf32>
    %63 = vector.broadcast %50 : vector<1x32xf32> to vector<16x32xf32>
    %64 = arith.addf %62, %63 : vector<16x32xf32>
    %cst_52 = arith.constant 0.000000e+00 : f32
    %65 = vector.broadcast %cst_52 : f32 to vector<16x32xf32>
    %66 = arith.maximumf %64, %65 : vector<16x32xf32>
    %67 = arith.truncf %66 : vector<16x32xf32> to vector<16x32xbf16>
    %c3 = arith.constant 3 : index
    %c0_53 = arith.constant 0 : index
    %c0_54 = arith.constant 0 : index
    %68 = vector.load %arg2[%c3, %c0_53, %c0_54] : memref<5x128x32xbf16, #tpu.memory_space<vmem>>, vector<1x128x32xbf16>
    %69 = vector.shape_cast %68 : vector<1x128x32xbf16> to vector<128x32xbf16>
    %70 = vector.extract_strided_slice %3 {offsets = [3, 0], sizes = [1, 32], strides = [1, 1]} : vector<5x32xf32> to vector<1x32xf32>
    %c0_55 = arith.constant 0 : index
    %c0_56 = arith.constant 0 : index
    %71 = vector.load %arg6[%c0_55, %c0_56] : memref<16x128xbf16, #tpu.memory_space<vmem>>, vector<16x32xbf16>
    tpu.vector_store %arg6[%c0_55, %c0_56], %67 {strides = array<i32>} : memref<16x128xbf16, #tpu.memory_space<vmem>>, vector<16x32xbf16>,
    %cst_57 = arith.constant dense<0.000000e+00> : vector<16x32xf32>
    %72 = tpu.matmul %0, %67, %cst_57 {dimension_numbers = #tpu.dot_dimension_numbers<[1], [0], [0], [1], [0, 0, 1, 1], [], []>} : vector<16x16xbf16>, vector<16x32xbf16>, vector<16x32xf32> -> vector<16x32xf32>
    %73 = arith.truncf %72 : vector<16x32xf32> to vector<16x32xbf16>
    %c0_58 = arith.constant 0 : index
    %c32_59 = arith.constant 32 : index
    %74 = vector.load %arg6[%c0_58, %c32_59] : memref<16x128xbf16, #tpu.memory_space<vmem>>, vector<16x32xbf16>
    tpu.vector_store %arg6[%c0_58, %c32_59], %73 {strides = array<i32>} : memref<16x128xbf16, #tpu.memory_space<vmem>>, vector<16x32xbf16>,
    %cst_60 = arith.constant dense<0.000000e+00> : vector<16x32xf32>
    %75 = tpu.matmul %0, %73, %cst_60 {dimension_numbers = #tpu.dot_dimension_numbers<[1], [0], [0], [1], [0, 0, 1, 1], [], []>} : vector<16x16xbf16>, vector<16x32xbf16>, vector<16x32xf32> -> vector<16x32xf32>
    %76 = arith.truncf %75 : vector<16x32xf32> to vector<16x32xbf16>
    %c0_61 = arith.constant 0 : index
    %c64_62 = arith.constant 64 : index
    %77 = vector.load %arg6[%c0_61, %c64_62] : memref<16x128xbf16, #tpu.memory_space<vmem>>, vector<16x32xbf16>
    tpu.vector_store %arg6[%c0_61, %c64_62], %76 {strides = array<i32>} : memref<16x128xbf16, #tpu.memory_space<vmem>>, vector<16x32xbf16>,
    %cst_63 = arith.constant dense<0.000000e+00> : vector<16x32xf32>
    %78 = tpu.matmul %0, %76, %cst_63 {dimension_numbers = #tpu.dot_dimension_numbers<[1], [0], [0], [1], [0, 0, 1, 1], [], []>} : vector<16x16xbf16>, vector<16x32xbf16>, vector<16x32xf32> -> vector<16x32xf32>
    %79 = arith.truncf %78 : vector<16x32xf32> to vector<16x32xbf16>
    %c0_64 = arith.constant 0 : index
    %c96_65 = arith.constant 96 : index
    %80 = vector.load %arg6[%c0_64, %c96_65] : memref<16x128xbf16, #tpu.memory_space<vmem>>, vector<16x32xbf16>
    tpu.vector_store %arg6[%c0_64, %c96_65], %79 {strides = array<i32>} : memref<16x128xbf16, #tpu.memory_space<vmem>>, vector<16x32xbf16>,
    %c0_66 = arith.constant 0 : index
    %c0_67 = arith.constant 0 : index
    %81 = vector.load %arg6[%c0_66, %c0_67] : memref<16x128xbf16, #tpu.memory_space<vmem>>, vector<16x128xbf16>
    %cst_68 = arith.constant dense<0.000000e+00> : vector<16x32xf32>
    %82 = tpu.matmul %81, %69, %cst_68 {dimension_numbers = #tpu.dot_dimension_numbers<[1], [0], [0], [1], [0, 0, 1, 1], [], []>} : vector<16x128xbf16>, vector<128x32xbf16>, vector<16x32xf32> -> vector<16x32xf32>
    %83 = vector.broadcast %70 : vector<1x32xf32> to vector<16x32xf32>
    %84 = arith.addf %82, %83 : vector<16x32xf32>
    %cst_69 = arith.constant 0.000000e+00 : f32
    %85 = vector.broadcast %cst_69 : f32 to vector<16x32xf32>
    %86 = arith.maximumf %84, %85 : vector<16x32xf32>
    %87 = arith.truncf %86 : vector<16x32xf32> to vector<16x32xbf16>
    %c4 = arith.constant 4 : index
    %c0_70 = arith.constant 0 : index
    %c0_71 = arith.constant 0 : index
    %88 = vector.load %arg2[%c4, %c0_70, %c0_71] : memref<5x128x32xbf16, #tpu.memory_space<vmem>>, vector<1x128x32xbf16>
    %89 = vector.shape_cast %88 : vector<1x128x32xbf16> to vector<128x32xbf16>
    %90 = vector.extract_strided_slice %3 {offsets = [4, 0], sizes = [1, 32], strides = [1, 1]} : vector<5x32xf32> to vector<1x32xf32>
    %c0_72 = arith.constant 0 : index
    %c0_73 = arith.constant 0 : index
    %91 = vector.load %arg6[%c0_72, %c0_73] : memref<16x128xbf16, #tpu.memory_space<vmem>>, vector<16x32xbf16>
    tpu.vector_store %arg6[%c0_72, %c0_73], %87 {strides = array<i32>} : memref<16x128xbf16, #tpu.memory_space<vmem>>, vector<16x32xbf16>,
    %cst_74 = arith.constant dense<0.000000e+00> : vector<16x32xf32>
    %92 = tpu.matmul %0, %87, %cst_74 {dimension_numbers = #tpu.dot_dimension_numbers<[1], [0], [0], [1], [0, 0, 1, 1], [], []>} : vector<16x16xbf16>, vector<16x32xbf16>, vector<16x32xf32> -> vector<16x32xf32>
    %93 = arith.truncf %92 : vector<16x32xf32> to vector<16x32xbf16>
    %c0_75 = arith.constant 0 : index
    %c32_76 = arith.constant 32 : index
    %94 = vector.load %arg6[%c0_75, %c32_76] : memref<16x128xbf16, #tpu.memory_space<vmem>>, vector<16x32xbf16>
    tpu.vector_store %arg6[%c0_75, %c32_76], %93 {strides = array<i32>} : memref<16x128xbf16, #tpu.memory_space<vmem>>, vector<16x32xbf16>,
    %cst_77 = arith.constant dense<0.000000e+00> : vector<16x32xf32>
    %95 = tpu.matmul %0, %93, %cst_77 {dimension_numbers = #tpu.dot_dimension_numbers<[1], [0], [0], [1], [0, 0, 1, 1], [], []>} : vector<16x16xbf16>, vector<16x32xbf16>, vector<16x32xf32> -> vector<16x32xf32>
    %96 = arith.truncf %95 : vector<16x32xf32> to vector<16x32xbf16>
    %c0_78 = arith.constant 0 : index
    %c64_79 = arith.constant 64 : index
    %97 = vector.load %arg6[%c0_78, %c64_79] : memref<16x128xbf16, #tpu.memory_space<vmem>>, vector<16x32xbf16>
    tpu.vector_store %arg6[%c0_78, %c64_79], %96 {strides = array<i32>} : memref<16x128xbf16, #tpu.memory_space<vmem>>, vector<16x32xbf16>,
    %cst_80 = arith.constant dense<0.000000e+00> : vector<16x32xf32>
    %98 = tpu.matmul %0, %96, %cst_80 {dimension_numbers = #tpu.dot_dimension_numbers<[1], [0], [0], [1], [0, 0, 1, 1], [], []>} : vector<16x16xbf16>, vector<16x32xbf16>, vector<16x32xf32> -> vector<16x32xf32>
    %99 = arith.truncf %98 : vector<16x32xf32> to vector<16x32xbf16>
    %c0_81 = arith.constant 0 : index
    %c96_82 = arith.constant 96 : index
    %100 = vector.load %arg6[%c0_81, %c96_82] : memref<16x128xbf16, #tpu.memory_space<vmem>>, vector<16x32xbf16>
    tpu.vector_store %arg6[%c0_81, %c96_82], %99 {strides = array<i32>} : memref<16x128xbf16, #tpu.memory_space<vmem>>, vector<16x32xbf16>,
    %c0_83 = arith.constant 0 : index
    %c0_84 = arith.constant 0 : index
    %101 = vector.load %arg6[%c0_83, %c0_84] : memref<16x128xbf16, #tpu.memory_space<vmem>>, vector<16x128xbf16>
    %cst_85 = arith.constant dense<0.000000e+00> : vector<16x32xf32>
    %102 = tpu.matmul %101, %89, %cst_85 {dimension_numbers = #tpu.dot_dimension_numbers<[1], [0], [0], [1], [0, 0, 1, 1], [], []>} : vector<16x128xbf16>, vector<128x32xbf16>, vector<16x32xf32> -> vector<16x32xf32>
    %103 = vector.broadcast %90 : vector<1x32xf32> to vector<16x32xf32>
    %104 = arith.addf %102, %103 : vector<16x32xf32>
    %cst_86 = arith.constant 0.000000e+00 : f32
    %105 = vector.broadcast %cst_86 : f32 to vector<16x32xf32>
    %106 = arith.maximumf %104, %105 : vector<16x32xf32>
    %c0_87 = arith.constant 0 : index
    %c0_88 = arith.constant 0 : index
    %107 = vector.load %arg4[%c0_87, %c0_88] : memref<2x48xf32, #tpu.memory_space<vmem>>, vector<2x48xf32>
    %108 = vector.extract_strided_slice %107 {offsets = [0, 0], sizes = [2, 16], strides = [1, 1]} : vector<2x48xf32> to vector<2x16xf32>
    %109 = vector.extract_strided_slice %107 {offsets = [0, 16], sizes = [2, 32], strides = [1, 1]} : vector<2x48xf32> to vector<2x32xf32>
    %cst_89 = arith.constant dense<0.000000e+00> : vector<2x32xf32>
    %110 = tpu.matmul %108, %106, %cst_89 {dimension_numbers = #tpu.dot_dimension_numbers<[1], [0], [0], [1], [0, 0, 1, 1], [], []>} : vector<2x16xf32>, vector<16x32xf32>, vector<2x32xf32> -> vector<2x32xf32>
    %111 = arith.mulf %110, %109 : vector<2x32xf32>
    %cst_90 = arith.constant dense<0.000000e+00> : vector<2x32xf32>
    %112 = tpu.matmul %111, %4, %cst_90 {dimension_numbers = #tpu.dot_dimension_numbers<[1], [0], [0], [1], [0, 0, 1, 1], [], []>} : vector<2x32xf32>, vector<32x32xf32>, vector<2x32xf32> -> vector<2x32xf32>
    %113 = vector.broadcast %6 : vector<1x32xf32> to vector<2x32xf32>
    %114 = arith.addf %112, %113 : vector<2x32xf32>
    %cst_91 = arith.constant dense<0.000000e+00> : vector<2x128xf32>
    %115 = tpu.matmul %114, %5, %cst_91 {dimension_numbers = #tpu.dot_dimension_numbers<[1], [0], [0], [1], [0, 0, 1, 1], [], []>} : vector<2x32xf32>, vector<32x128xf32>, vector<2x128xf32> -> vector<2x128xf32>
    %116 = vector.broadcast %7 : vector<1x128xf32> to vector<2x128xf32>
    %117 = arith.addf %115, %116 : vector<2x128xf32>
    %118 = arith.negf %117 : vector<2x128xf32>
    %119 = math.exp %118 : vector<2x128xf32>
    %cst_92 = arith.constant 1.000000e+00 : f32
    %120 = vector.broadcast %cst_92 : f32 to vector<2x128xf32>
    %121 = arith.addf %120, %119 : vector<2x128xf32>
    %122 = arith.divf %120, %121 : vector<2x128xf32>
    %c0_93 = arith.constant 0 : index
    %c0_94 = arith.constant 0 : index
    %123 = vector.load %arg5[%c0_93, %c0_94] : memref<2x128xf32, #tpu.memory_space<vmem>>, vector<2x128xf32>
    tpu.vector_store %arg5[%c0_93, %c0_94], %122 {strides = array<i32>} : memref<2x128xf32, #tpu.memory_space<vmem>>, vector<2x128xf32>,
    return
  }
}

</mosaic_0001>

<llo_original>
// kernel: tpu_custom_call.1
$region0: #{tpu_custom_call.1}
  #allocation0 [shape = 'u32[]', space=smem, size = 0x4, offset = 0x4, fixed_abs, tag = 'smem constant byte address 0x4 - core index']
  #allocation1 [shape = 'u32[144,128]{1,0:T(1,128)}', space=vmem, size = 0x12000, scoped, tag = 'internal scratch']
  #allocation2 [shape = 'bf16[16,128]{1,0:T(16,128)(2,1)}', space=vmem, size = 0x1000, scoped, tag = 'scratch operand']
  %s0 = inlined_call_operand.vmem [shape: bf16[16,16], index: 0, kind: input, shape index: {}]
  %s1 = inlined_call_operand.vmem [shape: bf16[16,32], index: 1, kind: input, shape index: {}]
  %s2 = inlined_call_operand.vmem [shape: bf16[5,128,32], index: 2, kind: input, shape index: {}]
  %s3 = inlined_call_operand.vmem [shape: f32[41,256], index: 3, kind: input, shape index: {}]
  %s4 = inlined_call_operand.vmem [shape: f32[2,48], index: 4, kind: input, shape index: {}]
  %s5 = inlined_call_operand.hbm [shape: f32[2,128], index: 5, kind: output, shape index: {}]
  %s6 = sld [smem:[#allocation0]]
  $region30: #{tpu_custom_call.1} parent=0
    _
  %s8 = ssub.s32 1, %s6
  %s9 = scalar_select 0, %s8, %s6
  $region1: #{tpu_custom_call.1} parent=0
    #allocation3 [shape = 'u8[1024]{0}', space=vmem, size = 0x400, scoped, tag = 'output window, operand 0, single buffered']
    #allocation4 [shape = 's32[1]{0}', space=sflag, size = 0x4, scoped, tag = 'scoped memory for tpu_custom_call.1']
    %10 = vsyncpa [#allocation4], 0
    // Predicated region
    $region2: #{tpu_custom_call.1} parent=1 // pred_check
      _
    $region3: #{tpu_custom_call.1} parent=1 // pred_check_branch
      %12 = sbr.rel (0) target = $region5
    $region4: #{tpu_custom_call.1} parent=1 // pred_region
      _
    $region5: #{tpu_custom_call.1} parent=1 // pred_fallthru
      _
    // Predicated region
    $region6: #{tpu_custom_call.1} parent=1 // pred_check
      _
    $region7: #{tpu_custom_call.1} parent=1 // pred_check_branch
      %14 = sbr.rel (0) target = $region9
    $region8: #{tpu_custom_call.1} parent=1 // pred_region
      _
    $region9: #{tpu_custom_call.1} parent=1 // pred_fallthru
      _
    // Predicated region
    $region10: #{tpu_custom_call.1} parent=1 // pred_check
      _
    $region11: #{tpu_custom_call.1} parent=1 // pred_check_branch
      %16 = sbr.rel (0) target = $region13
    $region12: #{tpu_custom_call.1} parent=1 // pred_region
      _
    $region13: #{tpu_custom_call.1} parent=1 // pred_fallthru
      _
    // Predicated region
    $region14: #{tpu_custom_call.1} parent=1 // pred_check
      _
    $region15: #{tpu_custom_call.1} parent=1 // pred_check_branch
      %18 = sbr.rel (0) target = $region17
    $region16: #{tpu_custom_call.1} parent=1 // pred_region
      _
    $region17: #{tpu_custom_call.1} parent=1 // pred_fallthru
      _
    // Predicated region
    $region18: #{tpu_custom_call.1} parent=1 // pred_check
      _
    $region19: #{tpu_custom_call.1} parent=1 // pred_check_branch
      %20 = sbr.rel (0) target = $region21
    $region20: #{tpu_custom_call.1} parent=1 // pred_region
      _
    $region21: #{tpu_custom_call.1} parent=1 // pred_fallthru
      _
    %v22 = vld [vmem:[%s0] sm:$0xf]
    %v23 = vld [vmem:[%s0 + $0x4] sm:$0xf]
    %v24 = vld [vmem:[%s1] sm:$0xf]
    %v25 = vld [vmem:[%s1 + $0x4] sm:$0xf]
    %v26 = vld [vmem:[%s3] sm:$0xff]
    %v27 = vld [vmem:[%s3 + $0x10] sm:$0xff]
    %v28 = vld [vmem:[%s3 + $0x18] sm:$0xff]
    %v29 = vld [vmem:[%s3 + $0x20] sm:$0xff]
    %v30 = vld [vmem:[%s3 + $0x28] sm:$0xff]
    %v31 = vld [vmem:[%s3 + $0x30] sm:$0xff]
    %v32 = vld [vmem:[%s3 + $0x38] sm:$0xff]
    %v33 = vld [vmem:[%s3 + $0x40] sm:$0xff]
    %v34 = vld [vmem:[%s3 + $0x48] sm:$0xff]
    %v35 = vld [vmem:[%s3 + $0x50] sm:$0x1]
    %v36 = vld [vmem:[%s3 + $0x58] sm:$0x1]
    %v37 = vld [vmem:[%s2] sm:$0xf]
    %v38 = vld [vmem:[%s2 + $0x4] sm:$0xf]
    %v39 = vld [vmem:[%s2 + $0x8] sm:$0xf]
    %v40 = vld [vmem:[%s2 + $0xc] sm:$0xf]
    %v41 = vld [vmem:[%s2 + $0x10] sm:$0xf]
    %v42 = vld [vmem:[%s2 + $0x14] sm:$0xf]
    %v43 = vld [vmem:[%s2 + $0x18] sm:$0xf]
    %v44 = vld [vmem:[%s2 + $0x1c] sm:$0xf]
    %v45 = vld [vmem:[%s2 + $0x20] sm:$0xf]
    %v46 = vld [vmem:[%s2 + $0x24] sm:$0xf]
    %v47 = vld [vmem:[%s2 + $0x28] sm:$0xf]
    %v48 = vld [vmem:[%s2 + $0x2c] sm:$0xf]
    %v49 = vld [vmem:[%s2 + $0x30] sm:$0xf]
    %v50 = vld [vmem:[%s2 + $0x34] sm:$0xf]
    %v51 = vld [vmem:[%s2 + $0x38] sm:$0xf]
    %v52 = vld [vmem:[%s2 + $0x3c] sm:$0xf]
    %v55 = vunpack.c.l.b16 %v24
    %v56 = vunpack.c.l.b16 %v25
    %v57 = vpack.c.b16 %v56, %v55
    %vm59 = vcmask 261120
    %60 = vst.msk [vmem:[#allocation2] sm:$0xff] %vm59, %v57
    %v63 = vunpack.c.l.b16 %v22
    %v64 = vunpack.c.l.b16 %v23
    %v65 = vpack.c.b16 %v64, %v63
    %vm66 = vcmask 130048
    %v68 = vsel %vm66, %v65, 0
    %70 = vmatprep.subr.bf16.mxu0 0
    %71 = vmatpush1.bf16.msra.mxu0 %v57
    %72 = vmatprep.subr.bf16.mxu0 0
    %73 = vmatpush1.bf16.msra.mxu0 0
    %74 = vmatprep.subr.bf16.mxu0 0
    %75 = vmatpush1.bf16.msra.mxu0 0
    %76 = vmatprep.subr.bf16.mxu0 0
    %77 = vmatpush1.bf16.msra.mxu0 0
    %78 = vmatprep.subr.bf16.mxu0 0
    %79 = vmatpush1.bf16.msra.mxu0 0
    %80 = vmatprep.subr.bf16.mxu0 0
    %81 = vmatpush1.bf16.msra.mxu0 0
    %82 = vmatprep.subr.bf16.mxu0 0
    %83 = vmatpush1.bf16.msra.mxu0 0
    %84 = vmatprep.subr.bf16.mxu0 0
    %85 = vmatpush1.bf16.msra.mxu0 0
    %86 = vmatprep.subr.bf16.mxu0 0
    %87 = vmatpush1.bf16.msra.mxu0 0
    %88 = vmatprep.subr.bf16.mxu0 0
    %89 = vmatpush1.bf16.msra.mxu0 0
    %90 = vmatprep.subr.bf16.mxu0 0
    %91 = vmatpush1.bf16.msra.mxu0 0
    %92 = vmatprep.subr.bf16.mxu0 0
    %93 = vmatpush1.bf16.msra.mxu0 0
    %94 = vmatprep.subr.bf16.mxu0 0
    %95 = vmatpush1.bf16.msra.mxu0 0
    %96 = vmatprep.subr.bf16.mxu0 0
    %97 = vmatpush1.bf16.msra.mxu0 0
    %98 = vmatprep.subr.bf16.mxu0 0
    %99 = vmatpush1.bf16.msra.mxu0 0
    %100 = vmatprep.subr.bf16.mxu0 0
    %101 = vmatpush1.bf16.msra.mxu0 0
    %102 = vmatprep.mubr.bf16.mxu0 0
    %103 = vmatmul.mubr.bf16.gmra.mrb[0].mxu0 %v68
    %v104 = vpop.f32.mrb[0].mxu0
    %v105 = vadd.f32 0.0, %v104
    %v106 = vpop.f32.mrb[0].mxu0
    %v107 = vpop.f32.mrb[0].mxu0
    %v108 = vadd.f32 0.0, %v107
    %v109 = vpop.f32.mrb[0].mxu0
    %110 = vdwg.mxu0
    %v111 = vpack.c.bf16 %v108, %v105
    %113 = vrot.lane.b32.xlu0 %v111, 32
    %v114 = vpop.permute.xlu0 %113
    %vm116 = vcmask 523520
    %117 = vst.msk [vmem:[#allocation2] sm:$0xff] %vm116, %v114
    %118 = vmatprep.subr.bf16.mxu0 0
    %119 = vmatpush1.bf16.msra.mxu0 %v111
    %120 = vmatprep.subr.bf16.mxu0 0
    %121 = vmatpush1.bf16.msra.mxu0 0
    %122 = vmatprep.subr.bf16.mxu0 0
    %123 = vmatpush1.bf16.msra.mxu0 0
    %124 = vmatprep.subr.bf16.mxu0 0
    %125 = vmatpush1.bf16.msra.mxu0 0
    %126 = vmatprep.subr.bf16.mxu0 0
    %127 = vmatpush1.bf16.msra.mxu0 0
    %128 = vmatprep.subr.bf16.mxu0 0
    %129 = vmatpush1.bf16.msra.mxu0 0
    %130 = vmatprep.subr.bf16.mxu0 0
    %131 = vmatpush1.bf16.msra.mxu0 0
    %132 = vmatprep.subr.bf16.mxu0 0
    %133 = vmatpush1.bf16.msra.mxu0 0
    %134 = vmatprep.subr.bf16.mxu0 0
    %135 = vmatpush1.bf16.msra.mxu0 0
    %136 = vmatprep.subr.bf16.mxu0 0
    %137 = vmatpush1.bf16.msra.mxu0 0
    %138 = vmatprep.subr.bf16.mxu0 0
    %139 = vmatpush1.bf16.msra.mxu0 0
    %140 = vmatprep.subr.bf16.mxu0 0
    %141 = vmatpush1.bf16.msra.mxu0 0
    %142 = vmatprep.subr.bf16.mxu0 0
    %143 = vmatpush1.bf16.msra.mxu0 0
    %144 = vmatprep.subr.bf16.mxu0 0
    %145 = vmatpush1.bf16.msra.mxu0 0
    %146 = vmatprep.subr.bf16.mxu0 0
    %147 = vmatpush1.bf16.msra.mxu0 0
    %148 = vmatprep.subr.bf16.mxu0 0
    %149 = vmatpush1.bf16.msra.mxu0 0
    %150 = vmatprep.mubr.bf16.mxu0 0
    %151 = vmatmul.mubr.bf16.gmra.mrb[0].mxu0 %v68
    %v152 = vpop.f32.mrb[0].mxu0
    %v153 = vadd.f32 0.0, %v152
    %v154 = vpop.f32.mrb[0].mxu0
    %v155 = vpop.f32.mrb[0].mxu0
    %v156 = vadd.f32 0.0, %v155
    %v157 = vpop.f32.mrb[0].mxu0
    %158 = vdwg.mxu0
    %v159 = vpack.c.bf16 %v156, %v153
    %161 = vrot.lane.b32.xlu0 %v159, 64
    %v162 = vpop.permute.xlu0 %161
    %vm164 = vcmask 785920
    %165 = vst.msk [vmem:[#allocation2] sm:$0xff] %vm164, %v162
    %166 = vmatprep.subr.bf16.mxu0 0
    %167 = vmatpush1.bf16.msra.mxu0 %v159
    %168 = vmatprep.subr.bf16.mxu0 0
    %169 = vmatpush1.bf16.msra.mxu0 0
    %170 = vmatprep.subr.bf16.mxu0 0
    %171 = vmatpush1.bf16.msra.mxu0 0
    %172 = vmatprep.subr.bf16.mxu0 0
    %173 = vmatpush1.bf16.msra.mxu0 0
    %174 = vmatprep.subr.bf16.mxu0 0
    %175 = vmatpush1.bf16.msra.mxu0 0
    %176 = vmatprep.subr.bf16.mxu0 0
    %177 = vmatpush1.bf16.msra.mxu0 0
    %178 = vmatprep.subr.bf16.mxu0 0
    %179 = vmatpush1.bf16.msra.mxu0 0
    %180 = vmatprep.subr.bf16.mxu0 0
    %181 = vmatpush1.bf16.msra.mxu0 0
    %182 = vmatprep.subr.bf16.mxu0 0
    %183 = vmatpush1.bf16.msra.mxu0 0
    %184 = vmatprep.subr.bf16.mxu0 0
    %185 = vmatpush1.bf16.msra.mxu0 0
    %186 = vmatprep.subr.bf16.mxu0 0
    %187 = vmatpush1.bf16.msra.mxu0 0
    %188 = vmatprep.subr.bf16.mxu0 0
    %189 = vmatpush1.bf16.msra.mxu0 0
    %190 = vmatprep.subr.bf16.mxu0 0
    %191 = vmatpush1.bf16.msra.mxu0 0
    %192 = vmatprep.subr.bf16.mxu0 0
    %193 = vmatpush1.bf16.msra.mxu0 0
    %194 = vmatprep.subr.bf16.mxu0 0
    %195 = vmatpush1.bf16.msra.mxu0 0
    %196 = vmatprep.subr.bf16.mxu0 0
    %197 = vmatpush1.bf16.msra.mxu0 0
    %198 = vmatprep.mubr.bf16.mxu0 0
    %199 = vmatmul.mubr.bf16.gmra.mrb[0].mxu0 %v68
    %v200 = vpop.f32.mrb[0].mxu0
    %v201 = vadd.f32 0.0, %v200
    %v202 = vpop.f32.mrb[0].mxu0
    %v203 = vpop.f32.mrb[0].mxu0
    %v204 = vadd.f32 0.0, %v203
    %v205 = vpop.f32.mrb[0].mxu0
    %206 = vdwg.mxu0
    %v207 = vpack.c.bf16 %v204, %v201
    %209 = vrot.lane.b32.xlu0 %v207, 96
    %v210 = vpop.permute.xlu0 %209
    %vm212 = vcmask 1048320
    %213 = vst.msk [vmem:[#allocation2] sm:$0xff] %vm212, %v210
    %v214 = vld [vmem:[#allocation2] sm:$0xff]
    %v215 = vlaneseq
    %v216 = vshrl.u32 %v215, 7
    %v217 = vsub.s32 0, %v216
    %v218 = vrot.slane %v26, %v217
    %v235 = vunpack.c.l.b16 %v37
    %v236 = vunpack.c.l.b16 %v38
    %v237 = vunpack.c.l.b16 %v39
    %v238 = vunpack.c.l.b16 %v40
    %v239 = vunpack.c.l.b16 %v41
    %v240 = vunpack.c.l.b16 %v42
    %v241 = vunpack.c.l.b16 %v43
    %v242 = vunpack.c.l.b16 %v44
    %v243 = vunpack.c.l.b16 %v45
    %v244 = vunpack.c.l.b16 %v46
    %v245 = vunpack.c.l.b16 %v47
    %v246 = vunpack.c.l.b16 %v48
    %v247 = vunpack.c.l.b16 %v49
    %v248 = vunpack.c.l.b16 %v50
    %v249 = vunpack.c.l.b16 %v51
    %v250 = vunpack.c.l.b16 %v52
    %v251 = vpack.c.b16 %v236, %v235
    %v252 = vpack.c.b16 %v238, %v237
    %v253 = vpack.c.b16 %v240, %v239
    %v254 = vpack.c.b16 %v242, %v241
    %v255 = vpack.c.b16 %v244, %v243
    %v256 = vpack.c.b16 %v246, %v245
    %v257 = vpack.c.b16 %v248, %v247
    %v258 = vpack.c.b16 %v250, %v249
    %267 = vmatprep.subr.bf16.mxu0 0
    %268 = vmatpush1.bf16.msra.mxu0 %v251
    %269 = vmatprep.subr.bf16.mxu0 0
    %270 = vmatpush1.bf16.msra.mxu0 %v252
    %271 = vmatprep.subr.bf16.mxu0 0
    %272 = vmatpush1.bf16.msra.mxu0 %v253
    %273 = vmatprep.subr.bf16.mxu0 0
    %274 = vmatpush1.bf16.msra.mxu0 %v254
    %275 = vmatprep.subr.bf16.mxu0 0
    %276 = vmatpush1.bf16.msra.mxu0 %v255
    %277 = vmatprep.subr.bf16.mxu0 0
    %278 = vmatpush1.bf16.msra.mxu0 %v256
    %279 = vmatprep.subr.bf16.mxu0 0
    %280 = vmatpush1.bf16.msra.mxu0 %v257
    %281 = vmatprep.subr.bf16.mxu0 0
    %282 = vmatpush1.bf16.msra.mxu0 %v258
    %283 = vmatprep.subr.bf16.mxu0 0
    %284 = vmatpush1.bf16.msra.mxu0 0
    %285 = vmatprep.subr.bf16.mxu0 0
    %286 = vmatpush1.bf16.msra.mxu0 0
    %287 = vmatprep.subr.bf16.mxu0 0
    %288 = vmatpush1.bf16.msra.mxu0 0
    %289 = vmatprep.subr.bf16.mxu0 0
    %290 = vmatpush1.bf16.msra.mxu0 0
    %291 = vmatprep.subr.bf16.mxu0 0
    %292 = vmatpush1.bf16.msra.mxu0 0
    %293 = vmatprep.subr.bf16.mxu0 0
    %294 = vmatpush1.bf16.msra.mxu0 0
    %295 = vmatprep.subr.bf16.mxu0 0
    %296 = vmatpush1.bf16.msra.mxu0 0
    %297 = vmatprep.subr.bf16.mxu0 0
    %298 = vmatpush1.bf16.msra.mxu0 0
    %299 = vmatprep.mubr.bf16.mxu0 0
    %300 = vmatmul.mubr.bf16.gmra.mrb[0].mxu0 %v214
    %v301 = vpop.f32.mrb[0].mxu0
    %v302 = vadd.f32 %v218, %v301
    %v303 = vpop.f32.mrb[0].mxu0
    %v304 = vpop.f32.mrb[0].mxu0
    %v305 = vadd.f32 %v218, %v304
    %v306 = vpop.f32.mrb[0].mxu0
    %307 = vdwg.mxu0
    %v308 = vmax.f32 %v302, 0.0
    %v309 = vmax.f32 %v305, 0.0
    %v310 = vpack.c.bf16 %v309, %v308
    %s311 = scalar_lea.vmem %s2, 64
    %v312 = vld [vmem:[%s311] sm:$0xf]
    %v313 = vld [vmem:[%s311 + $0x4] sm:$0xf]
    %v314 = vld [vmem:[%s311 + $0x8] sm:$0xf]
    %v315 = vld [vmem:[%s311 + $0xc] sm:$0xf]
    %v316 = vld [vmem:[%s311 + $0x10] sm:$0xf]
    %v317 = vld [vmem:[%s311 + $0x14] sm:$0xf]
    %v318 = vld [vmem:[%s311 + $0x18] sm:$0xf]
    %v319 = vld [vmem:[%s311 + $0x1c] sm:$0xf]
    %v320 = vld [vmem:[%s311 + $0x20] sm:$0xf]
    %v321 = vld [vmem:[%s311 + $0x24] sm:$0xf]
    %v322 = vld [vmem:[%s311 + $0x28] sm:$0xf]
    %v323 = vld [vmem:[%s311 + $0x2c] sm:$0xf]
    %v324 = vld [vmem:[%s311 + $0x30] sm:$0xf]
    %v325 = vld [vmem:[%s311 + $0x34] sm:$0xf]
    %v326 = vld [vmem:[%s311 + $0x38] sm:$0xf]
    %v327 = vld [vmem:[%s311 + $0x3c] sm:$0xf]
    %328 = vst.msk [vmem:[#allocation2] sm:$0xff] %vm59, %v310
    %329 = vmatprep.subr.bf16.mxu0 0
    %330 = vmatpush1.bf16.msra.mxu0 %v310
    %331 = vmatprep.subr.bf16.mxu0 0
    %332 = vmatpush1.bf16.msra.mxu0 0
    %333 = vmatprep.subr.bf16.mxu0 0
    %334 = vmatpush1.bf16.msra.mxu0 0
    %335 = vmatprep.subr.bf16.mxu0 0
    %336 = vmatpush1.bf16.msra.mxu0 0
    %337 = vmatprep.subr.bf16.mxu0 0
    %338 = vmatpush1.bf16.msra.mxu0 0
    %339 = vmatprep.subr.bf16.mxu0 0
    %340 = vmatpush1.bf16.msra.mxu0 0
    %341 = vmatprep.subr.bf16.mxu0 0
    %342 = vmatpush1.bf16.msra.mxu0 0
    %343 = vmatprep.subr.bf16.mxu0 0
    %344 = vmatpush1.bf16.msra.mxu0 0
    %345 = vmatprep.subr.bf16.mxu0 0
    %346 = vmatpush1.bf16.msra.mxu0 0
    %347 = vmatprep.subr.bf16.mxu0 0
    %348 = vmatpush1.bf16.msra.mxu0 0
    %349 = vmatprep.subr.bf16.mxu0 0
    %350 = vmatpush1.bf16.msra.mxu0 0
    %351 = vmatprep.subr.bf16.mxu0 0
    %352 = vmatpush1.bf16.msra.mxu0 0
    %353 = vmatprep.subr.bf16.mxu0 0
    %354 = vmatpush1.bf16.msra.mxu0 0
    %355 = vmatprep.subr.bf16.mxu0 0
    %356 = vmatpush1.bf16.msra.mxu0 0
    %357 = vmatprep.subr.bf16.mxu0 0
    %358 = vmatpush1.bf16.msra.mxu0 0
    %359 = vmatprep.subr.bf16.mxu0 0
    %360 = vmatpush1.bf16.msra.mxu0 0
    %361 = vmatprep.mubr.bf16.mxu0 0
    %362 = vmatmul.mubr.bf16.gmra.mrb[0].mxu0 %v68
    %v363 = vpop.f32.mrb[0].mxu0
    %v364 = vadd.f32 0.0, %v363
    %v365 = vpop.f32.mrb[0].mxu0
    %v366 = vpop.f32.mrb[0].mxu0
    %v367 = vadd.f32 0.0, %v366
    %v368 = vpop.f32.mrb[0].mxu0
    %369 = vdwg.mxu0
    %v370 = vpack.c.bf16 %v367, %v364
    %372 = vrot.lane.b32.xlu0 %v370, 32
    %v373 = vpop.permute.xlu0 %372
    %375 = vst.msk [vmem:[#allocation2] sm:$0xff] %vm116, %v373
    %376 = vmatprep.subr.bf16.mxu0 0
    %377 = vmatpush1.bf16.msra.mxu0 %v370
    %378 = vmatprep.subr.bf16.mxu0 0
    %379 = vmatpush1.bf16.msra.mxu0 0
    %380 = vmatprep.subr.bf16.mxu0 0
    %381 = vmatpush1.bf16.msra.mxu0 0
    %382 = vmatprep.subr.bf16.mxu0 0
    %383 = vmatpush1.bf16.msra.mxu0 0
    %384 = vmatprep.subr.bf16.mxu0 0
    %385 = vmatpush1.bf16.msra.mxu0 0
    %386 = vmatprep.subr.bf16.mxu0 0
    %387 = vmatpush1.bf16.msra.mxu0 0
    %388 = vmatprep.subr.bf16.mxu0 0
    %389 = vmatpush1.bf16.msra.mxu0 0
    %390 = vmatprep.subr.bf16.mxu0 0
    %391 = vmatpush1.bf16.msra.mxu0 0
    %392 = vmatprep.subr.bf16.mxu0 0
    %393 = vmatpush1.bf16.msra.mxu0 0
    %394 = vmatprep.subr.bf16.mxu0 0
    %395 = vmatpush1.bf16.msra.mxu0 0
    %396 = vmatprep.subr.bf16.mxu0 0
    %397 = vmatpush1.bf16.msra.mxu0 0
    %398 = vmatprep.subr.bf16.mxu0 0
    %399 = vmatpush1.bf16.msra.mxu0 0
    %400 = vmatprep.subr.bf16.mxu0 0
    %401 = vmatpush1.bf16.msra.mxu0 0
    %402 = vmatprep.subr.bf16.mxu0 0
    %403 = vmatpush1.bf16.msra.mxu0 0
    %404 = vmatprep.subr.bf16.mxu0 0
    %405 = vmatpush1.bf16.msra.mxu0 0
    %406 = vmatprep.subr.bf16.mxu0 0
    %407 = vmatpush1.bf16.msra.mxu0 0
    %408 = vmatprep.mubr.bf16.mxu0 0
    %409 = vmatmul.mubr.bf16.gmra.mrb[0].mxu0 %v68
    %v410 = vpop.f32.mrb[0].mxu0
    %v411 = vadd.f32 0.0, %v410
    %v412 = vpop.f32.mrb[0].mxu0
    %v413 = vpop.f32.mrb[0].mxu0
    %v414 = vadd.f32 0.0, %v413
    %v415 = vpop.f32.mrb[0].mxu0
    %416 = vdwg.mxu0
    %v417 = vpack.c.bf16 %v414, %v411
    %419 = vrot.lane.b32.xlu0 %v417, 64
    %v420 = vpop.permute.xlu0 %419
    %422 = vst.msk [vmem:[#allocation2] sm:$0xff] %vm164, %v420
    %423 = vmatprep.subr.bf16.mxu0 0
    %424 = vmatpush1.bf16.msra.mxu0 %v417
    %425 = vmatprep.subr.bf16.mxu0 0
    %426 = vmatpush1.bf16.msra.mxu0 0
    %427 = vmatprep.subr.bf16.mxu0 0
    %428 = vmatpush1.bf16.msra.mxu0 0
    %429 = vmatprep.subr.bf16.mxu0 0
    %430 = vmatpush1.bf16.msra.mxu0 0
    %431 = vmatprep.subr.bf16.mxu0 0
    %432 = vmatpush1.bf16.msra.mxu0 0
    %433 = vmatprep.subr.bf16.mxu0 0
    %434 = vmatpush1.bf16.msra.mxu0 0
    %435 = vmatprep.subr.bf16.mxu0 0
    %436 = vmatpush1.bf16.msra.mxu0 0
    %437 = vmatprep.subr.bf16.mxu0 0
    %438 = vmatpush1.bf16.msra.mxu0 0
    %439 = vmatprep.subr.bf16.mxu0 0
    %440 = vmatpush1.bf16.msra.mxu0 0
    %441 = vmatprep.subr.bf16.mxu0 0
    %442 = vmatpush1.bf16.msra.mxu0 0
    %443 = vmatprep.subr.bf16.mxu0 0
    %444 = vmatpush1.bf16.msra.mxu0 0
    %445 = vmatprep.subr.bf16.mxu0 0
    %446 = vmatpush1.bf16.msra.mxu0 0
    %447 = vmatprep.subr.bf16.mxu0 0
    %448 = vmatpush1.bf16.msra.mxu0 0
    %449 = vmatprep.subr.bf16.mxu0 0
    %450 = vmatpush1.bf16.msra.mxu0 0
    %451 = vmatprep.subr.bf16.mxu0 0
    %452 = vmatpush1.bf16.msra.mxu0 0
    %453 = vmatprep.subr.bf16.mxu0 0
    %454 = vmatpush1.bf16.msra.mxu0 0
    %455 = vmatprep.mubr.bf16.mxu0 0
    %456 = vmatmul.mubr.bf16.gmra.mrb[0].mxu0 %v68
    %v457 = vpop.f32.mrb[0].mxu0
    %v458 = vadd.f32 0.0, %v457
    %v459 = vpop.f32.mrb[0].mxu0
    %v460 = vpop.f32.mrb[0].mxu0
    %v461 = vadd.f32 0.0, %v460
    %v462 = vpop.f32.mrb[0].mxu0
    %463 = vdwg.mxu0
    %v464 = vpack.c.bf16 %v461, %v458
    %466 = vrot.lane.b32.xlu0 %v464, 96
    %v467 = vpop.permute.xlu0 %466
    %469 = vst.msk [vmem:[#allocation2] sm:$0xff] %vm212, %v467
    %v470 = vld [vmem:[#allocation2] sm:$0xff]
    %v471 = vlaneseq
    %v472 = vshrl.u32 %v471, 7
    %v473 = vsub.s32 1, %v472
    %v474 = vrot.slane %v26, %v473
    %v491 = vunpack.c.l.b16 %v312
    %v492 = vunpack.c.l.b16 %v313
    %v493 = vunpack.c.l.b16 %v314
    %v494 = vunpack.c.l.b16 %v315
    %v495 = vunpack.c.l.b16 %v316
    %v496 = vunpack.c.l.b16 %v317
    %v497 = vunpack.c.l.b16 %v318
    %v498 = vunpack.c.l.b16 %v319
    %v499 = vunpack.c.l.b16 %v320
    %v500 = vunpack.c.l.b16 %v321
    %v501 = vunpack.c.l.b16 %v322
    %v502 = vunpack.c.l.b16 %v323
    %v503 = vunpack.c.l.b16 %v324
    %v504 = vunpack.c.l.b16 %v325
    %v505 = vunpack.c.l.b16 %v326
    %v506 = vunpack.c.l.b16 %v327
    %v507 = vpack.c.b16 %v492, %v491
    %v508 = vpack.c.b16 %v494, %v493
    %v509 = vpack.c.b16 %v496, %v495
    %v510 = vpack.c.b16 %v498, %v497
    %v511 = vpack.c.b16 %v500, %v499
    %v512 = vpack.c.b16 %v502, %v501
    %v513 = vpack.c.b16 %v504, %v503
    %v514 = vpack.c.b16 %v506, %v505
    %523 = vmatprep.subr.bf16.mxu0 0
    %524 = vmatpush1.bf16.msra.mxu0 %v507
    %525 = vmatprep.subr.bf16.mxu0 0
    %526 = vmatpush1.bf16.msra.mxu0 %v508
    %527 = vmatprep.subr.bf16.mxu0 0
    %528 = vmatpush1.bf16.msra.mxu0 %v509
    %529 = vmatprep.subr.bf16.mxu0 0
    %530 = vmatpush1.bf16.msra.mxu0 %v510
    %531 = vmatprep.subr.bf16.mxu0 0
    %532 = vmatpush1.bf16.msra.mxu0 %v511
    %533 = vmatprep.subr.bf16.mxu0 0
    %534 = vmatpush1.bf16.msra.mxu0 %v512
    %535 = vmatprep.subr.bf16.mxu0 0
    %536 = vmatpush1.bf16.msra.mxu0 %v513
    %537 = vmatprep.subr.bf16.mxu0 0
    %538 = vmatpush1.bf16.msra.mxu0 %v514
    %539 = vmatprep.subr.bf16.mxu0 0
    %540 = vmatpush1.bf16.msra.mxu0 0
    %541 = vmatprep.subr.bf16.mxu0 0
    %542 = vmatpush1.bf16.msra.mxu0 0
    %543 = vmatprep.subr.bf16.mxu0 0
    %544 = vmatpush1.bf16.msra.mxu0 0
    %545 = vmatprep.subr.bf16.mxu0 0
    %546 = vmatpush1.bf16.msra.mxu0 0
    %547 = vmatprep.subr.bf16.mxu0 0
    %548 = vmatpush1.bf16.msra.mxu0 0
    %549 = vmatprep.subr.bf16.mxu0 0
    %550 = vmatpush1.bf16.msra.mxu0 0
    %551 = vmatprep.subr.bf16.mxu0 0
    %552 = vmatpush1.bf16.msra.mxu0 0
    %553 = vmatprep.subr.bf16.mxu0 0
    %554 = vmatpush1.bf16.msra.mxu0 0
    %555 = vmatprep.mubr.bf16.mxu0 0
    %556 = vmatmul.mubr.bf16.gmra.mrb[0].mxu0 %v470
    %v557 = vpop.f32.mrb[0].mxu0
    %v558 = vadd.f32 %v474, %v557
    %v559 = vpop.f32.mrb[0].mxu0
    %v560 = vpop.f32.mrb[0].mxu0
    %v561 = vadd.f32 %v474, %v560
    %v562 = vpop.f32.mrb[0].mxu0
    %563 = vdwg.mxu0
    %v564 = vmax.f32 %v558, 0.0
    %v565 = vmax.f32 %v561, 0.0
    %v566 = vpack.c.bf16 %v565, %v564
    %s567 = scalar_lea.vmem %s2, 128
    %v568 = vld [vmem:[%s567] sm:$0xf]
    %v569 = vld [vmem:[%s567 + $0x4] sm:$0xf]
    %v570 = vld [vmem:[%s567 + $0x8] sm:$0xf]
    %v571 = vld [vmem:[%s567 + $0xc] sm:$0xf]
    %v572 = vld [vmem:[%s567 + $0x10] sm:$0xf]
    %v573 = vld [vmem:[%s567 + $0x14] sm:$0xf]
    %v574 = vld [vmem:[%s567 + $0x18] sm:$0xf]
    %v575 = vld [vmem:[%s567 + $0x1c] sm:$0xf]
    %v576 = vld [vmem:[%s567 + $0x20] sm:$0xf]
    %v577 = vld [vmem:[%s567 + $0x24] sm:$0xf]
    %v578 = vld [vmem:[%s567 + $0x28] sm:$0xf]
    %v579 = vld [vmem:[%s567 + $0x2c] sm:$0xf]
    %v580 = vld [vmem:[%s567 + $0x30] sm:$0xf]
    %v581 = vld [vmem:[%s567 + $0x34] sm:$0xf]
    %v582 = vld [vmem:[%s567 + $0x38] sm:$0xf]
    %v583 = vld [vmem:[%s567 + $0x3c] sm:$0xf]
    %584 = vst.msk [vmem:[#allocation2] sm:$0xff] %vm59, %v566
    %585 = vmatprep.subr.bf16.mxu0 0
    %586 = vmatpush1.bf16.msra.mxu0 %v566
    %587 = vmatprep.subr.bf16.mxu0 0
    %588 = vmatpush1.bf16.msra.mxu0 0
    %589 = vmatprep.subr.bf16.mxu0 0
    %590 = vmatpush1.bf16.msra.mxu0 0
    %591 = vmatprep.subr.bf16.mxu0 0
    %592 = vmatpush1.bf16.msra.mxu0 0
    %593 = vmatprep.subr.bf16.mxu0 0
    %594 = vmatpush1.bf16.msra.mxu0 0
    %595 = vmatprep.subr.bf16.mxu0 0
    %596 = vmatpush1.bf16.msra.mxu0 0
    %597 = vmatprep.subr.bf16.mxu0 0
    %598 = vmatpush1.bf16.msra.mxu0 0
    %599 = vmatprep.subr.bf16.mxu0 0
    %600 = vmatpush1.bf16.msra.mxu0 0
    %601 = vmatprep.subr.bf16.mxu0 0
    %602 = vmatpush1.bf16.msra.mxu0 0
    %603 = vmatprep.subr.bf16.mxu0 0
    %604 = vmatpush1.bf16.msra.mxu0 0
    %605 = vmatprep.subr.bf16.mxu0 0
    %606 = vmatpush1.bf16.msra.mxu0 0
    %607 = vmatprep.subr.bf16.mxu0 0
    %608 = vmatpush1.bf16.msra.mxu0 0
    %609 = vmatprep.subr.bf16.mxu0 0
    %610 = vmatpush1.bf16.msra.mxu0 0
    %611 = vmatprep.subr.bf16.mxu0 0
    %612 = vmatpush1.bf16.msra.mxu0 0
    %613 = vmatprep.subr.bf16.mxu0 0
    %614 = vmatpush1.bf16.msra.mxu0 0
    %615 = vmatprep.subr.bf16.mxu0 0
    %616 = vmatpush1.bf16.msra.mxu0 0
    %617 = vmatprep.mubr.bf16.mxu0 0
    %618 = vmatmul.mubr.bf16.gmra.mrb[0].mxu0 %v68
    %v619 = vpop.f32.mrb[0].mxu0
    %v620 = vadd.f32 0.0, %v619
    %v621 = vpop.f32.mrb[0].mxu0
    %v622 = vpop.f32.mrb[0].mxu0
    %v623 = vadd.f32 0.0, %v622
    %v624 = vpop.f32.mrb[0].mxu0
    %625 = vdwg.mxu0
    %v626 = vpack.c.bf16 %v623, %v620
    %628 = vrot.lane.b32.xlu0 %v626, 32
    %v629 = vpop.permute.xlu0 %628
    %631 = vst.msk [vmem:[#allocation2] sm:$0xff] %vm116, %v629
    %632 = vmatprep.subr.bf16.mxu0 0
    %633 = vmatpush1.bf16.msra.mxu0 %v626
    %634 = vmatprep.subr.bf16.mxu0 0
    %635 = vmatpush1.bf16.msra.mxu0 0
    %636 = vmatprep.subr.bf16.mxu0 0
    %637 = vmatpush1.bf16.msra.mxu0 0
    %638 = vmatprep.subr.bf16.mxu0 0
    %639 = vmatpush1.bf16.msra.mxu0 0
    %640 = vmatprep.subr.bf16.mxu0 0
    %641 = vmatpush1.bf16.msra.mxu0 0
    %642 = vmatprep.subr.bf16.mxu0 0
    %643 = vmatpush1.bf16.msra.mxu0 0
    %644 = vmatprep.subr.bf16.mxu0 0
    %645 = vmatpush1.bf16.msra.mxu0 0
    %646 = vmatprep.subr.bf16.mxu0 0
    %647 = vmatpush1.bf16.msra.mxu0 0
    %648 = vmatprep.subr.bf16.mxu0 0
    %649 = vmatpush1.bf16.msra.mxu0 0
    %650 = vmatprep.subr.bf16.mxu0 0
    %651 = vmatpush1.bf16.msra.mxu0 0
    %652 = vmatprep.subr.bf16.mxu0 0
    %653 = vmatpush1.bf16.msra.mxu0 0
    %654 = vmatprep.subr.bf16.mxu0 0
    %655 = vmatpush1.bf16.msra.mxu0 0
    %656 = vmatprep.subr.bf16.mxu0 0
    %657 = vmatpush1.bf16.msra.mxu0 0
    %658 = vmatprep.subr.bf16.mxu0 0
    %659 = vmatpush1.bf16.msra.mxu0 0
    %660 = vmatprep.subr.bf16.mxu0 0
    %661 = vmatpush1.bf16.msra.mxu0 0
    %662 = vmatprep.subr.bf16.mxu0 0
    %663 = vmatpush1.bf16.msra.mxu0 0
    %664 = vmatprep.mubr.bf16.mxu0 0
    %665 = vmatmul.mubr.bf16.gmra.mrb[0].mxu0 %v68
    %v666 = vpop.f32.mrb[0].mxu0
    %v667 = vadd.f32 0.0, %v666
    %v668 = vpop.f32.mrb[0].mxu0
    %v669 = vpop.f32.mrb[0].mxu0
    %v670 = vadd.f32 0.0, %v669
    %v671 = vpop.f32.mrb[0].mxu0
    %672 = vdwg.mxu0
    %v673 = vpack.c.bf16 %v670, %v667
    %675 = vrot.lane.b32.xlu0 %v673, 64
    %v676 = vpop.permute.xlu0 %675
    %678 = vst.msk [vmem:[#allocation2] sm:$0xff] %vm164, %v676
    %679 = vmatprep.subr.bf16.mxu0 0
    %680 = vmatpush1.bf16.msra.mxu0 %v673
    %681 = vmatprep.subr.bf16.mxu0 0
    %682 = vmatpush1.bf16.msra.mxu0 0
    %683 = vmatprep.subr.bf16.mxu0 0
    %684 = vmatpush1.bf16.msra.mxu0 0
    %685 = vmatprep.subr.bf16.mxu0 0
    %686 = vmatpush1.bf16.msra.mxu0 0
    %687 = vmatprep.subr.bf16.mxu0 0
    %688 = vmatpush1.bf16.msra.mxu0 0
    %689 = vmatprep.subr.bf16.mxu0 0
    %690 = vmatpush1.bf16.msra.mxu0 0
    %691 = vmatprep.subr.bf16.mxu0 0
    %692 = vmatpush1.bf16.msra.mxu0 0
    %693 = vmatprep.subr.bf16.mxu0 0
    %694 = vmatpush1.bf16.msra.mxu0 0
    %695 = vmatprep.subr.bf16.mxu0 0
    %696 = vmatpush1.bf16.msra.mxu0 0
    %697 = vmatprep.subr.bf16.mxu0 0
    %698 = vmatpush1.bf16.msra.mxu0 0
    %699 = vmatprep.subr.bf16.mxu0 0
    %700 = vmatpush1.bf16.msra.mxu0 0
    %701 = vmatprep.subr.bf16.mxu0 0
    %702 = vmatpush1.bf16.msra.mxu0 0
    %703 = vmatprep.subr.bf16.mxu0 0
    %704 = vmatpush1.bf16.msra.mxu0 0
    %705 = vmatprep.subr.bf16.mxu0 0
    %706 = vmatpush1.bf16.msra.mxu0 0
    %707 = vmatprep.subr.bf16.mxu0 0
    %708 = vmatpush1.bf16.msra.mxu0 0
    %709 = vmatprep.subr.bf16.mxu0 0
    %710 = vmatpush1.bf16.msra.mxu0 0
    %711 = vmatprep.mubr.bf16.mxu0 0
    %712 = vmatmul.mubr.bf16.gmra.mrb[0].mxu0 %v68
    %v713 = vpop.f32.mrb[0].mxu0
    %v714 = vadd.f32 0.0, %v713
    %v715 = vpop.f32.mrb[0].mxu0
    %v716 = vpop.f32.mrb[0].mxu0
    %v717 = vadd.f32 0.0, %v716
    %v718 = vpop.f32.mrb[0].mxu0
    %719 = vdwg.mxu0
    %v720 = vpack.c.bf16 %v717, %v714
    %722 = vrot.lane.b32.xlu0 %v720, 96
    %v723 = vpop.permute.xlu0 %722
    %725 = vst.msk [vmem:[#allocation2] sm:$0xff] %vm212, %v723
    %v726 = vld [vmem:[#allocation2] sm:$0xff]
    %v727 = vlaneseq
    %v728 = vshrl.u32 %v727, 7
    %v729 = vsub.s32 2, %v728
    %v730 = vrot.slane %v26, %v729
    %v747 = vunpack.c.l.b16 %v568
    %v748 = vunpack.c.l.b16 %v569
    %v749 = vunpack.c.l.b16 %v570
    %v750 = vunpack.c.l.b16 %v571
    %v751 = vunpack.c.l.b16 %v572
    %v752 = vunpack.c.l.b16 %v573
    %v753 = vunpack.c.l.b16 %v574
    %v754 = vunpack.c.l.b16 %v575
    %v755 = vunpack.c.l.b16 %v576
    %v756 = vunpack.c.l.b16 %v577
    %v757 = vunpack.c.l.b16 %v578
    %v758 = vunpack.c.l.b16 %v579
    %v759 = vunpack.c.l.b16 %v580
    %v760 = vunpack.c.l.b16 %v581
    %v761 = vunpack.c.l.b16 %v582
    %v762 = vunpack.c.l.b16 %v583
    %v763 = vpack.c.b16 %v748, %v747
    %v764 = vpack.c.b16 %v750, %v749
    %v765 = vpack.c.b16 %v752, %v751
    %v766 = vpack.c.b16 %v754, %v753
    %v767 = vpack.c.b16 %v756, %v755
    %v768 = vpack.c.b16 %v758, %v757
    %v769 = vpack.c.b16 %v760, %v759
    %v770 = vpack.c.b16 %v762, %v761
    %779 = vmatprep.subr.bf16.mxu0 0
    %780 = vmatpush1.bf16.msra.mxu0 %v763
    %781 = vmatprep.subr.bf16.mxu0 0
    %782 = vmatpush1.bf16.msra.mxu0 %v764
    %783 = vmatprep.subr.bf16.mxu0 0
    %784 = vmatpush1.bf16.msra.mxu0 %v765
    %785 = vmatprep.subr.bf16.mxu0 0
    %786 = vmatpush1.bf16.msra.mxu0 %v766
    %787 = vmatprep.subr.bf16.mxu0 0
    %788 = vmatpush1.bf16.msra.mxu0 %v767
    %789 = vmatprep.subr.bf16.mxu0 0
    %790 = vmatpush1.bf16.msra.mxu0 %v768
    %791 = vmatprep.subr.bf16.mxu0 0
    %792 = vmatpush1.bf16.msra.mxu0 %v769
    %793 = vmatprep.subr.bf16.mxu0 0
    %794 = vmatpush1.bf16.msra.mxu0 %v770
    %795 = vmatprep.subr.bf16.mxu0 0
    %796 = vmatpush1.bf16.msra.mxu0 0
    %797 = vmatprep.subr.bf16.mxu0 0
    %798 = vmatpush1.bf16.msra.mxu0 0
    %799 = vmatprep.subr.bf16.mxu0 0
    %800 = vmatpush1.bf16.msra.mxu0 0
    %801 = vmatprep.subr.bf16.mxu0 0
    %802 = vmatpush1.bf16.msra.mxu0 0
    %803 = vmatprep.subr.bf16.mxu0 0
    %804 = vmatpush1.bf16.msra.mxu0 0
    %805 = vmatprep.subr.bf16.mxu0 0
    %806 = vmatpush1.bf16.msra.mxu0 0
    %807 = vmatprep.subr.bf16.mxu0 0
    %808 = vmatpush1.bf16.msra.mxu0 0
    %809 = vmatprep.subr.bf16.mxu0 0
    %810 = vmatpush1.bf16.msra.mxu0 0
    %811 = vmatprep.mubr.bf16.mxu0 0
    %812 = vmatmul.mubr.bf16.gmra.mrb[0].mxu0 %v726
    %v813 = vpop.f32.mrb[0].mxu0
    %v814 = vadd.f32 %v730, %v813
    %v815 = vpop.f32.mrb[0].mxu0
    %v816 = vpop.f32.mrb[0].mxu0
    %v817 = vadd.f32 %v730, %v816
    %v818 = vpop.f32.mrb[0].mxu0
    %819 = vdwg.mxu0
    %v820 = vmax.f32 %v814, 0.0
    %v821 = vmax.f32 %v817, 0.0
    %v822 = vpack.c.bf16 %v821, %v820
    %s823 = scalar_lea.vmem %s2, 192
    %v824 = vld [vmem:[%s823] sm:$0xf]
    %v825 = vld [vmem:[%s823 + $0x4] sm:$0xf]
    %v826 = vld [vmem:[%s823 + $0x8] sm:$0xf]
    %v827 = vld [vmem:[%s823 + $0xc] sm:$0xf]
    %v828 = vld [vmem:[%s823 + $0x10] sm:$0xf]
    %v829 = vld [vmem:[%s823 + $0x14] sm:$0xf]
    %v830 = vld [vmem:[%s823 + $0x18] sm:$0xf]
    %v831 = vld [vmem:[%s823 + $0x1c] sm:$0xf]
    %v832 = vld [vmem:[%s823 + $0x20] sm:$0xf]
    %v833 = vld [vmem:[%s823 + $0x24] sm:$0xf]
    %v834 = vld [vmem:[%s823 + $0x28] sm:$0xf]
    %v835 = vld [vmem:[%s823 + $0x2c] sm:$0xf]
    %v836 = vld [vmem:[%s823 + $0x30] sm:$0xf]
    %v837 = vld [vmem:[%s823 + $0x34] sm:$0xf]
    %v838 = vld [vmem:[%s823 + $0x38] sm:$0xf]
    %v839 = vld [vmem:[%s823 + $0x3c] sm:$0xf]
    %840 = vst.msk [vmem:[#allocation2] sm:$0xff] %vm59, %v822
    %841 = vmatprep.subr.bf16.mxu0 0
    %842 = vmatpush1.bf16.msra.mxu0 %v822
    %843 = vmatprep.subr.bf16.mxu0 0
    %844 = vmatpush1.bf16.msra.mxu0 0
    %845 = vmatprep.subr.bf16.mxu0 0
    %846 = vmatpush1.bf16.msra.mxu0 0
    %847 = vmatprep.subr.bf16.mxu0 0
    %848 = vmatpush1.bf16.msra.mxu0 0
    %849 = vmatprep.subr.bf16.mxu0 0
    %850 = vmatpush1.bf16.msra.mxu0 0
    %851 = vmatprep.subr.bf16.mxu0 0
    %852 = vmatpush1.bf16.msra.mxu0 0
    %853 = vmatprep.subr.bf16.mxu0 0
    %854 = vmatpush1.bf16.msra.mxu0 0
    %855 = vmatprep.subr.bf16.mxu0 0
    %856 = vmatpush1.bf16.msra.mxu0 0
    %857 = vmatprep.subr.bf16.mxu0 0
    %858 = vmatpush1.bf16.msra.mxu0 0
    %859 = vmatprep.subr.bf16.mxu0 0
    %860 = vmatpush1.bf16.msra.mxu0 0
    %861 = vmatprep.subr.bf16.mxu0 0
    %862 = vmatpush1.bf16.msra.mxu0 0
    %863 = vmatprep.subr.bf16.mxu0 0
    %864 = vmatpush1.bf16.msra.mxu0 0
    %865 = vmatprep.subr.bf16.mxu0 0
    %866 = vmatpush1.bf16.msra.mxu0 0
    %867 = vmatprep.subr.bf16.mxu0 0
    %868 = vmatpush1.bf16.msra.mxu0 0
    %869 = vmatprep.subr.bf16.mxu0 0
    %870 = vmatpush1.bf16.msra.mxu0 0
    %871 = vmatprep.subr.bf16.mxu0 0
    %872 = vmatpush1.bf16.msra.mxu0 0
    %873 = vmatprep.mubr.bf16.mxu0 0
    %874 = vmatmul.mubr.bf16.gmra.mrb[0].mxu0 %v68
    %v875 = vpop.f32.mrb[0].mxu0
    %v876 = vadd.f32 0.0, %v875
    %v877 = vpop.f32.mrb[0].mxu0
    %v878 = vpop.f32.mrb[0].mxu0
    %v879 = vadd.f32 0.0, %v878
    %v880 = vpop.f32.mrb[0].mxu0
    %881 = vdwg.mxu0
    %v882 = vpack.c.bf16 %v879, %v876
    %884 = vrot.lane.b32.xlu0 %v882, 32
    %v885 = vpop.permute.xlu0 %884
    %887 = vst.msk [vmem:[#allocation2] sm:$0xff] %vm116, %v885
    %888 = vmatprep.subr.bf16.mxu0 0
    %889 = vmatpush1.bf16.msra.mxu0 %v882
    %890 = vmatprep.subr.bf16.mxu0 0
    %891 = vmatpush1.bf16.msra.mxu0 0
    %892 = vmatprep.subr.bf16.mxu0 0
    %893 = vmatpush1.bf16.msra.mxu0 0
    %894 = vmatprep.subr.bf16.mxu0 0
    %895 = vmatpush1.bf16.msra.mxu0 0
    %896 = vmatprep.subr.bf16.mxu0 0
    %897 = vmatpush1.bf16.msra.mxu0 0
    %898 = vmatprep.subr.bf16.mxu0 0
    %899 = vmatpush1.bf16.msra.mxu0 0
    %900 = vmatprep.subr.bf16.mxu0 0
    %901 = vmatpush1.bf16.msra.mxu0 0
    %902 = vmatprep.subr.bf16.mxu0 0
    %903 = vmatpush1.bf16.msra.mxu0 0
    %904 = vmatprep.subr.bf16.mxu0 0
    %905 = vmatpush1.bf16.msra.mxu0 0
    %906 = vmatprep.subr.bf16.mxu0 0
    %907 = vmatpush1.bf16.msra.mxu0 0
    %908 = vmatprep.subr.bf16.mxu0 0
    %909 = vmatpush1.bf16.msra.mxu0 0
    %910 = vmatprep.subr.bf16.mxu0 0
    %911 = vmatpush1.bf16.msra.mxu0 0
    %912 = vmatprep.subr.bf16.mxu0 0
    %913 = vmatpush1.bf16.msra.mxu0 0
    %914 = vmatprep.subr.bf16.mxu0 0
    %915 = vmatpush1.bf16.msra.mxu0 0
    %916 = vmatprep.subr.bf16.mxu0 0
    %917 = vmatpush1.bf16.msra.mxu0 0
    %918 = vmatprep.subr.bf16.mxu0 0
    %919 = vmatpush1.bf16.msra.mxu0 0
    %920 = vmatprep.mubr.bf16.mxu0 0
    %921 = vmatmul.mubr.bf16.gmra.mrb[0].mxu0 %v68
    %v922 = vpop.f32.mrb[0].mxu0
    %v923 = vadd.f32 0.0, %v922
    %v924 = vpop.f32.mrb[0].mxu0
    %v925 = vpop.f32.mrb[0].mxu0
    %v926 = vadd.f32 0.0, %v925
    %v927 = vpop.f32.mrb[0].mxu0
    %928 = vdwg.mxu0
    %v929 = vpack.c.bf16 %v926, %v923
    %931 = vrot.lane.b32.xlu0 %v929, 64
    %v932 = vpop.permute.xlu0 %931
    %934 = vst.msk [vmem:[#allocation2] sm:$0xff] %vm164, %v932
    %935 = vmatprep.subr.bf16.mxu0 0
    %936 = vmatpush1.bf16.msra.mxu0 %v929
    %937 = vmatprep.subr.bf16.mxu0 0
    %938 = vmatpush1.bf16.msra.mxu0 0
    %939 = vmatprep.subr.bf16.mxu0 0
    %940 = vmatpush1.bf16.msra.mxu0 0
    %941 = vmatprep.subr.bf16.mxu0 0
    %942 = vmatpush1.bf16.msra.mxu0 0
    %943 = vmatprep.subr.bf16.mxu0 0
    %944 = vmatpush1.bf16.msra.mxu0 0
    %945 = vmatprep.subr.bf16.mxu0 0
    %946 = vmatpush1.bf16.msra.mxu0 0
    %947 = vmatprep.subr.bf16.mxu0 0
    %948 = vmatpush1.bf16.msra.mxu0 0
    %949 = vmatprep.subr.bf16.mxu0 0
    %950 = vmatpush1.bf16.msra.mxu0 0
    %951 = vmatprep.subr.bf16.mxu0 0
    %952 = vmatpush1.bf16.msra.mxu0 0
    %953 = vmatprep.subr.bf16.mxu0 0
    %954 = vmatpush1.bf16.msra.mxu0 0
    %955 = vmatprep.subr.bf16.mxu0 0
    %956 = vmatpush1.bf16.msra.mxu0 0
    %957 = vmatprep.subr.bf16.mxu0 0
    %958 = vmatpush1.bf16.msra.mxu0 0
    %959 = vmatprep.subr.bf16.mxu0 0
    %960 = vmatpush1.bf16.msra.mxu0 0
    %961 = vmatprep.subr.bf16.mxu0 0
    %962 = vmatpush1.bf16.msra.mxu0 0
    %963 = vmatprep.subr.bf16.mxu0 0
    %964 = vmatpush1.bf16.msra.mxu0 0
    %965 = vmatprep.subr.bf16.mxu0 0
    %966 = vmatpush1.bf16.msra.mxu0 0
    %967 = vmatprep.mubr.bf16.mxu0 0
    %968 = vmatmul.mubr.bf16.gmra.mrb[0].mxu0 %v68
    %v969 = vpop.f32.mrb[0].mxu0
    %v970 = vadd.f32 0.0, %v969
    %v971 = vpop.f32.mrb[0].mxu0
    %v972 = vpop.f32.mrb[0].mxu0
    %v973 = vadd.f32 0.0, %v972
    %v974 = vpop.f32.mrb[0].mxu0
    %975 = vdwg.mxu0
    %v976 = vpack.c.bf16 %v973, %v970
    %978 = vrot.lane.b32.xlu0 %v976, 96
    %v979 = vpop.permute.xlu0 %978
    %981 = vst.msk [vmem:[#allocation2] sm:$0xff] %vm212, %v979
    %v982 = vld [vmem:[#allocation2] sm:$0xff]
    %v983 = vlaneseq
    %v984 = vshrl.u32 %v983, 7
    %v985 = vsub.s32 3, %v984
    %v986 = vrot.slane %v26, %v985
    %v1003 = vunpack.c.l.b16 %v824
    %v1004 = vunpack.c.l.b16 %v825
    %v1005 = vunpack.c.l.b16 %v826
    %v1006 = vunpack.c.l.b16 %v827
    %v1007 = vunpack.c.l.b16 %v828
    %v1008 = vunpack.c.l.b16 %v829
    %v1009 = vunpack.c.l.b16 %v830
    %v1010 = vunpack.c.l.b16 %v831
    %v1011 = vunpack.c.l.b16 %v832
    %v1012 = vunpack.c.l.b16 %v833
    %v1013 = vunpack.c.l.b16 %v834
    %v1014 = vunpack.c.l.b16 %v835
    %v1015 = vunpack.c.l.b16 %v836
    %v1016 = vunpack.c.l.b16 %v837
    %v1017 = vunpack.c.l.b16 %v838
    %v1018 = vunpack.c.l.b16 %v839
    %v1019 = vpack.c.b16 %v1004, %v1003
    %v1020 = vpack.c.b16 %v1006, %v1005
    %v1021 = vpack.c.b16 %v1008, %v1007
    %v1022 = vpack.c.b16 %v1010, %v1009
    %v1023 = vpack.c.b16 %v1012, %v1011
    %v1024 = vpack.c.b16 %v1014, %v1013
    %v1025 = vpack.c.b16 %v1016, %v1015
    %v1026 = vpack.c.b16 %v1018, %v1017
    %1035 = vmatprep.subr.bf16.mxu0 0
    %1036 = vmatpush1.bf16.msra.mxu0 %v1019
    %1037 = vmatprep.subr.bf16.mxu0 0
    %1038 = vmatpush1.bf16.msra.mxu0 %v1020
    %1039 = vmatprep.subr.bf16.mxu0 0
    %1040 = vmatpush1.bf16.msra.mxu0 %v1021
    %1041 = vmatprep.subr.bf16.mxu0 0
    %1042 = vmatpush1.bf16.msra.mxu0 %v1022
    %1043 = vmatprep.subr.bf16.mxu0 0
    %1044 = vmatpush1.bf16.msra.mxu0 %v1023
    %1045 = vmatprep.subr.bf16.mxu0 0
    %1046 = vmatpush1.bf16.msra.mxu0 %v1024
    %1047 = vmatprep.subr.bf16.mxu0 0
    %1048 = vmatpush1.bf16.msra.mxu0 %v1025
    %1049 = vmatprep.subr.bf16.mxu0 0
    %1050 = vmatpush1.bf16.msra.mxu0 %v1026
    %1051 = vmatprep.subr.bf16.mxu0 0
    %1052 = vmatpush1.bf16.msra.mxu0 0
    %1053 = vmatprep.subr.bf16.mxu0 0
    %1054 = vmatpush1.bf16.msra.mxu0 0
    %1055 = vmatprep.subr.bf16.mxu0 0
    %1056 = vmatpush1.bf16.msra.mxu0 0
    %1057 = vmatprep.subr.bf16.mxu0 0
    %1058 = vmatpush1.bf16.msra.mxu0 0
    %1059 = vmatprep.subr.bf16.mxu0 0
    %1060 = vmatpush1.bf16.msra.mxu0 0
    %1061 = vmatprep.subr.bf16.mxu0 0
    %1062 = vmatpush1.bf16.msra.mxu0 0
    %1063 = vmatprep.subr.bf16.mxu0 0
    %1064 = vmatpush1.bf16.msra.mxu0 0
    %1065 = vmatprep.subr.bf16.mxu0 0
    %1066 = vmatpush1.bf16.msra.mxu0 0
    %1067 = vmatprep.mubr.bf16.mxu0 0
    %1068 = vmatmul.mubr.bf16.gmra.mrb[0].mxu0 %v982
    %v1069 = vpop.f32.mrb[0].mxu0
    %v1070 = vadd.f32 %v986, %v1069
    %v1071 = vpop.f32.mrb[0].mxu0
    %v1072 = vpop.f32.mrb[0].mxu0
    %v1073 = vadd.f32 %v986, %v1072
    %v1074 = vpop.f32.mrb[0].mxu0
    %1075 = vdwg.mxu0
    %v1076 = vmax.f32 %v1070, 0.0
    %v1077 = vmax.f32 %v1073, 0.0
    %v1078 = vpack.c.bf16 %v1077, %v1076
    %s1079 = scalar_lea.vmem %s2, 256
    %v1080 = vld [vmem:[%s1079] sm:$0xf]
    %v1081 = vld [vmem:[%s1079 + $0x4] sm:$0xf]
    %v1082 = vld [vmem:[%s1079 + $0x8] sm:$0xf]
    %v1083 = vld [vmem:[%s1079 + $0xc] sm:$0xf]
    %v1084 = vld [vmem:[%s1079 + $0x10] sm:$0xf]
    %v1085 = vld [vmem:[%s1079 + $0x14] sm:$0xf]
    %v1086 = vld [vmem:[%s1079 + $0x18] sm:$0xf]
    %v1087 = vld [vmem:[%s1079 + $0x1c] sm:$0xf]
    %v1088 = vld [vmem:[%s1079 + $0x20] sm:$0xf]
    %v1089 = vld [vmem:[%s1079 + $0x24] sm:$0xf]
    %v1090 = vld [vmem:[%s1079 + $0x28] sm:$0xf]
    %v1091 = vld [vmem:[%s1079 + $0x2c] sm:$0xf]
    %v1092 = vld [vmem:[%s1079 + $0x30] sm:$0xf]
    %v1093 = vld [vmem:[%s1079 + $0x34] sm:$0xf]
    %v1094 = vld [vmem:[%s1079 + $0x38] sm:$0xf]
    %v1095 = vld [vmem:[%s1079 + $0x3c] sm:$0xf]
    %1096 = vst.msk [vmem:[#allocation2] sm:$0xff] %vm59, %v1078
    %1097 = vmatprep.subr.bf16.mxu0 0
    %1098 = vmatpush1.bf16.msra.mxu0 %v1078
    %1099 = vmatprep.subr.bf16.mxu0 0
    %1100 = vmatpush1.bf16.msra.mxu0 0
    %1101 = vmatprep.subr.bf16.mxu0 0
    %1102 = vmatpush1.bf16.msra.mxu0 0
    %1103 = vmatprep.subr.bf16.mxu0 0
    %1104 = vmatpush1.bf16.msra.mxu0 0
    %1105 = vmatprep.subr.bf16.mxu0 0
    %1106 = vmatpush1.bf16.msra.mxu0 0
    %1107 = vmatprep.subr.bf16.mxu0 0
    %1108 = vmatpush1.bf16.msra.mxu0 0
    %1109 = vmatprep.subr.bf16.mxu0 0
    %1110 = vmatpush1.bf16.msra.mxu0 0
    %1111 = vmatprep.subr.bf16.mxu0 0
    %1112 = vmatpush1.bf16.msra.mxu0 0
    %1113 = vmatprep.subr.bf16.mxu0 0
    %1114 = vmatpush1.bf16.msra.mxu0 0
    %1115 = vmatprep.subr.bf16.mxu0 0
    %1116 = vmatpush1.bf16.msra.mxu0 0
    %1117 = vmatprep.subr.bf16.mxu0 0
    %1118 = vmatpush1.bf16.msra.mxu0 0
    %1119 = vmatprep.subr.bf16.mxu0 0
    %1120 = vmatpush1.bf16.msra.mxu0 0
    %1121 = vmatprep.subr.bf16.mxu0 0
    %1122 = vmatpush1.bf16.msra.mxu0 0
    %1123 = vmatprep.subr.bf16.mxu0 0
    %1124 = vmatpush1.bf16.msra.mxu0 0
    %1125 = vmatprep.subr.bf16.mxu0 0
    %1126 = vmatpush1.bf16.msra.mxu0 0
    %1127 = vmatprep.subr.bf16.mxu0 0
    %1128 = vmatpush1.bf16.msra.mxu0 0
    %1129 = vmatprep.mubr.bf16.mxu0 0
    %1130 = vmatmul.mubr.bf16.gmra.mrb[0].mxu0 %v68
    %v1131 = vpop.f32.mrb[0].mxu0
    %v1132 = vadd.f32 0.0, %v1131
    %v1133 = vpop.f32.mrb[0].mxu0
    %v1134 = vpop.f32.mrb[0].mxu0
    %v1135 = vadd.f32 0.0, %v1134
    %v1136 = vpop.f32.mrb[0].mxu0
    %1137 = vdwg.mxu0
    %v1138 = vpack.c.bf16 %v1135, %v1132
    %1140 = vrot.lane.b32.xlu0 %v1138, 32
    %v1141 = vpop.permute.xlu0 %1140
    %1143 = vst.msk [vmem:[#allocation2] sm:$0xff] %vm116, %v1141
    %1144 = vmatprep.subr.bf16.mxu0 0
    %1145 = vmatpush1.bf16.msra.mxu0 %v1138
    %1146 = vmatprep.subr.bf16.mxu0 0
    %1147 = vmatpush1.bf16.msra.mxu0 0
    %1148 = vmatprep.subr.bf16.mxu0 0
    %1149 = vmatpush1.bf16.msra.mxu0 0
    %1150 = vmatprep.subr.bf16.mxu0 0
    %1151 = vmatpush1.bf16.msra.mxu0 0
    %1152 = vmatprep.subr.bf16.mxu0 0
    %1153 = vmatpush1.bf16.msra.mxu0 0
    %1154 = vmatprep.subr.bf16.mxu0 0
    %1155 = vmatpush1.bf16.msra.mxu0 0
    %1156 = vmatprep.subr.bf16.mxu0 0
    %1157 = vmatpush1.bf16.msra.mxu0 0
    %1158 = vmatprep.subr.bf16.mxu0 0
    %1159 = vmatpush1.bf16.msra.mxu0 0
    %1160 = vmatprep.subr.bf16.mxu0 0
    %1161 = vmatpush1.bf16.msra.mxu0 0
    %1162 = vmatprep.subr.bf16.mxu0 0
    %1163 = vmatpush1.bf16.msra.mxu0 0
    %1164 = vmatprep.subr.bf16.mxu0 0
    %1165 = vmatpush1.bf16.msra.mxu0 0
    %1166 = vmatprep.subr.bf16.mxu0 0
    %1167 = vmatpush1.bf16.msra.mxu0 0
    %1168 = vmatprep.subr.bf16.mxu0 0
    %1169 = vmatpush1.bf16.msra.mxu0 0
    %1170 = vmatprep.subr.bf16.mxu0 0
    %1171 = vmatpush1.bf16.msra.mxu0 0
    %1172 = vmatprep.subr.bf16.mxu0 0
    %1173 = vmatpush1.bf16.msra.mxu0 0
    %1174 = vmatprep.subr.bf16.mxu0 0
    %1175 = vmatpush1.bf16.msra.mxu0 0
    %1176 = vmatprep.mubr.bf16.mxu0 0
    %1177 = vmatmul.mubr.bf16.gmra.mrb[0].mxu0 %v68
    %v1178 = vpop.f32.mrb[0].mxu0
    %v1179 = vadd.f32 0.0, %v1178
    %v1180 = vpop.f32.mrb[0].mxu0
    %v1181 = vpop.f32.mrb[0].mxu0
    %v1182 = vadd.f32 0.0, %v1181
    %v1183 = vpop.f32.mrb[0].mxu0
    %1184 = vdwg.mxu0
    %v1185 = vpack.c.bf16 %v1182, %v1179
    %1187 = vrot.lane.b32.xlu0 %v1185, 64
    %v1188 = vpop.permute.xlu0 %1187
    %1190 = vst.msk [vmem:[#allocation2] sm:$0xff] %vm164, %v1188
    %1191 = vmatprep.subr.bf16.mxu0 0
    %1192 = vmatpush1.bf16.msra.mxu0 %v1185
    %1193 = vmatprep.subr.bf16.mxu0 0
    %1194 = vmatpush1.bf16.msra.mxu0 0
    %1195 = vmatprep.subr.bf16.mxu0 0
    %1196 = vmatpush1.bf16.msra.mxu0 0
    %1197 = vmatprep.subr.bf16.mxu0 0
    %1198 = vmatpush1.bf16.msra.mxu0 0
    %1199 = vmatprep.subr.bf16.mxu0 0
    %1200 = vmatpush1.bf16.msra.mxu0 0
    %1201 = vmatprep.subr.bf16.mxu0 0
    %1202 = vmatpush1.bf16.msra.mxu0 0
    %1203 = vmatprep.subr.bf16.mxu0 0
    %1204 = vmatpush1.bf16.msra.mxu0 0
    %1205 = vmatprep.subr.bf16.mxu0 0
    %1206 = vmatpush1.bf16.msra.mxu0 0
    %1207 = vmatprep.subr.bf16.mxu0 0
    %1208 = vmatpush1.bf16.msra.mxu0 0
    %1209 = vmatprep.subr.bf16.mxu0 0
    %1210 = vmatpush1.bf16.msra.mxu0 0
    %1211 = vmatprep.subr.bf16.mxu0 0
    %1212 = vmatpush1.bf16.msra.mxu0 0
    %1213 = vmatprep.subr.bf16.mxu0 0
    %1214 = vmatpush1.bf16.msra.mxu0 0
    %1215 = vmatprep.subr.bf16.mxu0 0
    %1216 = vmatpush1.bf16.msra.mxu0 0
    %1217 = vmatprep.subr.bf16.mxu0 0
    %1218 = vmatpush1.bf16.msra.mxu0 0
    %1219 = vmatprep.subr.bf16.mxu0 0
    %1220 = vmatpush1.bf16.msra.mxu0 0
    %1221 = vmatprep.subr.bf16.mxu0 0
    %1222 = vmatpush1.bf16.msra.mxu0 0
    %1223 = vmatprep.mubr.bf16.mxu0 0
    %1224 = vmatmul.mubr.bf16.gmra.mrb[0].mxu0 %v68
    %v1225 = vpop.f32.mrb[0].mxu0
    %v1226 = vadd.f32 0.0, %v1225
    %v1227 = vpop.f32.mrb[0].mxu0
    %v1228 = vpop.f32.mrb[0].mxu0
    %v1229 = vadd.f32 0.0, %v1228
    %v1230 = vpop.f32.mrb[0].mxu0
    %1231 = vdwg.mxu0
    %v1232 = vpack.c.bf16 %v1229, %v1226
    %1234 = vrot.lane.b32.xlu0 %v1232, 96
    %v1235 = vpop.permute.xlu0 %1234
    %1237 = vst.msk [vmem:[#allocation2] sm:$0xff] %vm212, %v1235
    %v1238 = vld [vmem:[#allocation2] sm:$0xff]
    %v1239 = vlaneseq
    %v1240 = vshrl.u32 %v1239, 7
    %v1241 = vsub.s32 4, %v1240
    %v1242 = vrot.slane %v26, %v1241
    %v1259 = vunpack.c.l.b16 %v1080
    %v1260 = vunpack.c.l.b16 %v1081
    %v1261 = vunpack.c.l.b16 %v1082
    %v1262 = vunpack.c.l.b16 %v1083
    %v1263 = vunpack.c.l.b16 %v1084
    %v1264 = vunpack.c.l.b16 %v1085
    %v1265 = vunpack.c.l.b16 %v1086
    %v1266 = vunpack.c.l.b16 %v1087
    %v1267 = vunpack.c.l.b16 %v1088
    %v1268 = vunpack.c.l.b16 %v1089
    %v1269 = vunpack.c.l.b16 %v1090
    %v1270 = vunpack.c.l.b16 %v1091
    %v1271 = vunpack.c.l.b16 %v1092
    %v1272 = vunpack.c.l.b16 %v1093
    %v1273 = vunpack.c.l.b16 %v1094
    %v1274 = vunpack.c.l.b16 %v1095
    %v1275 = vpack.c.b16 %v1260, %v1259
    %v1276 = vpack.c.b16 %v1262, %v1261
    %v1277 = vpack.c.b16 %v1264, %v1263
    %v1278 = vpack.c.b16 %v1266, %v1265
    %v1279 = vpack.c.b16 %v1268, %v1267
    %v1280 = vpack.c.b16 %v1270, %v1269
    %v1281 = vpack.c.b16 %v1272, %v1271
    %v1282 = vpack.c.b16 %v1274, %v1273
    %1291 = vmatprep.subr.bf16.mxu0 0
    %1292 = vmatpush1.bf16.msra.mxu0 %v1275
    %1293 = vmatprep.subr.bf16.mxu0 0
    %1294 = vmatpush1.bf16.msra.mxu0 %v1276
    %1295 = vmatprep.subr.bf16.mxu0 0
    %1296 = vmatpush1.bf16.msra.mxu0 %v1277
    %1297 = vmatprep.subr.bf16.mxu0 0
    %1298 = vmatpush1.bf16.msra.mxu0 %v1278
    %1299 = vmatprep.subr.bf16.mxu0 0
    %1300 = vmatpush1.bf16.msra.mxu0 %v1279
    %1301 = vmatprep.subr.bf16.mxu0 0
    %1302 = vmatpush1.bf16.msra.mxu0 %v1280
    %1303 = vmatprep.subr.bf16.mxu0 0
    %1304 = vmatpush1.bf16.msra.mxu0 %v1281
    %1305 = vmatprep.subr.bf16.mxu0 0
    %1306 = vmatpush1.bf16.msra.mxu0 %v1282
    %1307 = vmatprep.subr.bf16.mxu0 0
    %1308 = vmatpush1.bf16.msra.mxu0 0
    %1309 = vmatprep.subr.bf16.mxu0 0
    %1310 = vmatpush1.bf16.msra.mxu0 0
    %1311 = vmatprep.subr.bf16.mxu0 0
    %1312 = vmatpush1.bf16.msra.mxu0 0
    %1313 = vmatprep.subr.bf16.mxu0 0
    %1314 = vmatpush1.bf16.msra.mxu0 0
    %1315 = vmatprep.subr.bf16.mxu0 0
    %1316 = vmatpush1.bf16.msra.mxu0 0
    %1317 = vmatprep.subr.bf16.mxu0 0
    %1318 = vmatpush1.bf16.msra.mxu0 0
    %1319 = vmatprep.subr.bf16.mxu0 0
    %1320 = vmatpush1.bf16.msra.mxu0 0
    %1321 = vmatprep.subr.bf16.mxu0 0
    %1322 = vmatpush1.bf16.msra.mxu0 0
    %1323 = vmatprep.mubr.bf16.mxu0 0
    %1324 = vmatmul.mubr.bf16.gmra.mrb[0].mxu0 %v1238
    %v1325 = vpop.f32.mrb[0].mxu0
    %v1326 = vadd.f32 %v1242, %v1325
    %v1327 = vpop.f32.mrb[0].mxu0
    %v1328 = vpop.f32.mrb[0].mxu0
    %v1329 = vadd.f32 %v1242, %v1328
    %v1330 = vpop.f32.mrb[0].mxu0
    %1331 = vdwg.mxu0
    %v1332 = vmax.f32 %v1326, 0.0
    %v1333 = vmax.f32 %v1329, 0.0
    %v1334 = vld [vmem:[%s4] sm:$0x3]
    %v1336 = vsel %vm66, %v1334, 0
    %1338 = vmatprep.subr.mxu0 0.0
    %1339 = vmatpush1.msra.mxu0 %v1332
    %1340 = vmatprep.subr.mxu0 0.0
    %1341 = vmatpush1.msra.mxu0 %v1333
    %1342 = vmatprep.subr.mxu0 0.0
    %1343 = vmatpush1.msra.mxu0 0.0
    %1344 = vmatprep.subr.mxu0 0.0
    %1345 = vmatpush1.msra.mxu0 0.0
    %1346 = vmatprep.subr.mxu0 0.0
    %1347 = vmatpush1.msra.mxu0 0.0
    %1348 = vmatprep.subr.mxu0 0.0
    %1349 = vmatpush1.msra.mxu0 0.0
    %1350 = vmatprep.subr.mxu0 0.0
    %1351 = vmatpush1.msra.mxu0 0.0
    %1352 = vmatprep.subr.mxu0 0.0
    %1353 = vmatpush1.msra.mxu0 0.0
    %1354 = vmatprep.subr.mxu0 0.0
    %1355 = vmatpush1.msra.mxu0 0.0
    %1356 = vmatprep.subr.mxu0 0.0
    %1357 = vmatpush1.msra.mxu0 0.0
    %1358 = vmatprep.subr.mxu0 0.0
    %1359 = vmatpush1.msra.mxu0 0.0
    %1360 = vmatprep.subr.mxu0 0.0
    %1361 = vmatpush1.msra.mxu0 0.0
    %1362 = vmatprep.subr.mxu0 0.0
    %1363 = vmatpush1.msra.mxu0 0.0
    %1364 = vmatprep.subr.mxu0 0.0
    %1365 = vmatpush1.msra.mxu0 0.0
    %1366 = vmatprep.subr.mxu0 0.0
    %1367 = vmatpush1.msra.mxu0 0.0
    %1368 = vmatprep.subr.mxu0 0.0
    %1369 = vmatpush1.msra.mxu0 0.0
    %1370 = vmatprep.subr.mxu0 0.0
    %1371 = vmatpush1.msra.mxu0 0.0
    %1372 = vmatprep.subr.mxu0 0.0
    %1373 = vmatpush1.msra.mxu0 0.0
    %1374 = vmatprep.subr.mxu0 0.0
    %1375 = vmatpush1.msra.mxu0 0.0
    %1376 = vmatprep.subr.mxu0 0.0
    %1377 = vmatpush1.msra.mxu0 0.0
    %1378 = vmatprep.subr.mxu0 0.0
    %1379 = vmatpush1.msra.mxu0 0.0
    %1380 = vmatprep.subr.mxu0 0.0
    %1381 = vmatpush1.msra.mxu0 0.0
    %1382 = vmatprep.subr.mxu0 0.0
    %1383 = vmatpush1.msra.mxu0 0.0
    %1384 = vmatprep.subr.mxu0 0.0
    %1385 = vmatpush1.msra.mxu0 0.0
    %1386 = vmatprep.subr.mxu0 0.0
    %1387 = vmatpush1.msra.mxu0 0.0
    %1388 = vmatprep.subr.mxu0 0.0
    %1389 = vmatpush1.msra.mxu0 0.0
    %1390 = vmatprep.subr.mxu0 0.0
    %1391 = vmatpush1.msra.mxu0 0.0
    %1392 = vmatprep.subr.mxu0 0.0
    %1393 = vmatpush1.msra.mxu0 0.0
    %1394 = vmatprep.subr.mxu0 0.0
    %1395 = vmatpush1.msra.mxu0 0.0
    %1396 = vmatprep.subr.mxu0 0.0
    %1397 = vmatpush1.msra.mxu0 0.0
    %1398 = vmatprep.subr.mxu0 0.0
    %1399 = vmatpush1.msra.mxu0 0.0
    %1400 = vmatprep.subr.mxu0 0.0
    %1401 = vmatpush1.msra.mxu0 0.0
    %1402 = vmatprep.mubr.f32.mxu0 0.0
    %1403 = vmatmul.mubr.f32.gmra.mrb[0].mxu0 %v1336
    %v1404 = vpop.f32.mrb[0].mxu0
    %v1405 = vadd.f32 0.0, %v1404
    %v1406 = vpop.f32.mrb[0].mxu0
    %1407 = vdwg.mxu0
    %1408 = vrot.lane.b32.xlu0 %v1334, 112
    %v1409 = vpop.permute.xlu0 %1408
    %v1411 = vmul.f32 %v1405, %v1409
    %v1412 = vlaneseq
    %v1413 = vshrl.u32 %v1412, 7
    %v1414 = vsub.s32 0, %v1413
    %v1415 = vrot.slane %v35, %v1414
    %v1417 = vsel %vm59, %v1411, 0
    %1419 = vmatprep.subr.mxu0 0.0
    %1420 = vmatpush1.msra.mxu0 %v27
    %1421 = vmatprep.subr.mxu0 0.0
    %1422 = vmatpush1.msra.mxu0 %v29
    %1423 = vmatprep.subr.mxu0 0.0
    %1424 = vmatpush1.msra.mxu0 %v31
    %1425 = vmatprep.subr.mxu0 0.0
    %1426 = vmatpush1.msra.mxu0 %v33
    %1427 = vmatprep.subr.mxu0 0.0
    %1428 = vmatpush1.msra.mxu0 0.0
    %1429 = vmatprep.subr.mxu0 0.0
    %1430 = vmatpush1.msra.mxu0 0.0
    %1431 = vmatprep.subr.mxu0 0.0
    %1432 = vmatpush1.msra.mxu0 0.0
    %1433 = vmatprep.subr.mxu0 0.0
    %1434 = vmatpush1.msra.mxu0 0.0
    %1435 = vmatprep.subr.mxu0 0.0
    %1436 = vmatpush1.msra.mxu0 0.0
    %1437 = vmatprep.subr.mxu0 0.0
    %1438 = vmatpush1.msra.mxu0 0.0
    %1439 = vmatprep.subr.mxu0 0.0
    %1440 = vmatpush1.msra.mxu0 0.0
    %1441 = vmatprep.subr.mxu0 0.0
    %1442 = vmatpush1.msra.mxu0 0.0
    %1443 = vmatprep.subr.mxu0 0.0
    %1444 = vmatpush1.msra.mxu0 0.0
    %1445 = vmatprep.subr.mxu0 0.0
    %1446 = vmatpush1.msra.mxu0 0.0
    %1447 = vmatprep.subr.mxu0 0.0
    %1448 = vmatpush1.msra.mxu0 0.0
    %1449 = vmatprep.subr.mxu0 0.0
    %1450 = vmatpush1.msra.mxu0 0.0
    %1451 = vmatprep.subr.mxu0 0.0
    %1452 = vmatpush1.msra.mxu0 0.0
    %1453 = vmatprep.subr.mxu0 0.0
    %1454 = vmatpush1.msra.mxu0 0.0
    %1455 = vmatprep.subr.mxu0 0.0
    %1456 = vmatpush1.msra.mxu0 0.0
    %1457 = vmatprep.subr.mxu0 0.0
    %1458 = vmatpush1.msra.mxu0 0.0
    %1459 = vmatprep.subr.mxu0 0.0
    %1460 = vmatpush1.msra.mxu0 0.0
    %1461 = vmatprep.subr.mxu0 0.0
    %1462 = vmatpush1.msra.mxu0 0.0
    %1463 = vmatprep.subr.mxu0 0.0
    %1464 = vmatpush1.msra.mxu0 0.0
    %1465 = vmatprep.subr.mxu0 0.0
    %1466 = vmatpush1.msra.mxu0 0.0
    %1467 = vmatprep.subr.mxu0 0.0
    %1468 = vmatpush1.msra.mxu0 0.0
    %1469 = vmatprep.subr.mxu0 0.0
    %1470 = vmatpush1.msra.mxu0 0.0
    %1471 = vmatprep.subr.mxu0 0.0
    %1472 = vmatpush1.msra.mxu0 0.0
    %1473 = vmatprep.subr.mxu0 0.0
    %1474 = vmatpush1.msra.mxu0 0.0
    %1475 = vmatprep.subr.mxu0 0.0
    %1476 = vmatpush1.msra.mxu0 0.0
    %1477 = vmatprep.subr.mxu0 0.0
    %1478 = vmatpush1.msra.mxu0 0.0
    %1479 = vmatprep.subr.mxu0 0.0
    %1480 = vmatpush1.msra.mxu0 0.0
    %1481 = vmatprep.subr.mxu0 0.0
    %1482 = vmatpush1.msra.mxu0 0.0
    %1483 = vmatprep.mubr.f32.mxu0 0.0
    %1484 = vmatmul.mubr.f32.gmra.mrb[0].mxu0 %v1417
    %v1485 = vpop.f32.mrb[0].mxu0
    %v1486 = vadd.f32 %v1415, %v1485
    %v1487 = vpop.f32.mrb[0].mxu0
    %1488 = vdwg.mxu0
    %v1489 = vlaneseq
    %v1490 = vshrl.u32 %v1489, 7
    %v1491 = vsub.s32 0, %v1490
    %v1492 = vrot.slane %v36, %v1491
    %v1494 = vsel %vm59, %v1486, 0
    %1496 = vmatprep.subr.mxu0 0.0
    %1497 = vmatpush1.msra.mxu0 %v28
    %1498 = vmatprep.subr.mxu0 0.0
    %1499 = vmatpush1.msra.mxu0 %v30
    %1500 = vmatprep.subr.mxu0 0.0
    %1501 = vmatpush1.msra.mxu0 %v32
    %1502 = vmatprep.subr.mxu0 0.0
    %1503 = vmatpush1.msra.mxu0 %v34
    %1504 = vmatprep.subr.mxu0 0.0
    %1505 = vmatpush1.msra.mxu0 0.0
    %1506 = vmatprep.subr.mxu0 0.0
    %1507 = vmatpush1.msra.mxu0 0.0
    %1508 = vmatprep.subr.mxu0 0.0
    %1509 = vmatpush1.msra.mxu0 0.0
    %1510 = vmatprep.subr.mxu0 0.0
    %1511 = vmatpush1.msra.mxu0 0.0
    %1512 = vmatprep.subr.mxu0 0.0
    %1513 = vmatpush1.msra.mxu0 0.0
    %1514 = vmatprep.subr.mxu0 0.0
    %1515 = vmatpush1.msra.mxu0 0.0
    %1516 = vmatprep.subr.mxu0 0.0
    %1517 = vmatpush1.msra.mxu0 0.0
    %1518 = vmatprep.subr.mxu0 0.0
    %1519 = vmatpush1.msra.mxu0 0.0
    %1520 = vmatprep.subr.mxu0 0.0
    %1521 = vmatpush1.msra.mxu0 0.0
    %1522 = vmatprep.subr.mxu0 0.0
    %1523 = vmatpush1.msra.mxu0 0.0
    %1524 = vmatprep.subr.mxu0 0.0
    %1525 = vmatpush1.msra.mxu0 0.0
    %1526 = vmatprep.subr.mxu0 0.0
    %1527 = vmatpush1.msra.mxu0 0.0
    %1528 = vmatprep.subr.mxu0 0.0
    %1529 = vmatpush1.msra.mxu0 0.0
    %1530 = vmatprep.subr.mxu0 0.0
    %1531 = vmatpush1.msra.mxu0 0.0
    %1532 = vmatprep.subr.mxu0 0.0
    %1533 = vmatpush1.msra.mxu0 0.0
    %1534 = vmatprep.subr.mxu0 0.0
    %1535 = vmatpush1.msra.mxu0 0.0
    %1536 = vmatprep.subr.mxu0 0.0
    %1537 = vmatpush1.msra.mxu0 0.0
    %1538 = vmatprep.subr.mxu0 0.0
    %1539 = vmatpush1.msra.mxu0 0.0
    %1540 = vmatprep.subr.mxu0 0.0
    %1541 = vmatpush1.msra.mxu0 0.0
    %1542 = vmatprep.subr.mxu0 0.0
    %1543 = vmatpush1.msra.mxu0 0.0
    %1544 = vmatprep.subr.mxu0 0.0
    %1545 = vmatpush1.msra.mxu0 0.0
    %1546 = vmatprep.subr.mxu0 0.0
    %1547 = vmatpush1.msra.mxu0 0.0
    %1548 = vmatprep.subr.mxu0 0.0
    %1549 = vmatpush1.msra.mxu0 0.0
    %1550 = vmatprep.subr.mxu0 0.0
    %1551 = vmatpush1.msra.mxu0 0.0
    %1552 = vmatprep.subr.mxu0 0.0
    %1553 = vmatpush1.msra.mxu0 0.0
    %1554 = vmatprep.subr.mxu0 0.0
    %1555 = vmatpush1.msra.mxu0 0.0
    %1556 = vmatprep.subr.mxu0 0.0
    %1557 = vmatpush1.msra.mxu0 0.0
    %1558 = vmatprep.subr.mxu0 0.0
    %1559 = vmatpush1.msra.mxu0 0.0
    %1560 = vmatprep.mubr.f32.mxu0 0.0
    %1561 = vmatmul.mubr.f32.gmra.mrb[0].mxu0 %v1494
    %v1562 = vpop.f32.mrb[0].mxu0
    %v1563 = vadd.f32 %v1492, %v1562
    %v1564 = vpop.f32.mrb[0].mxu0
    %1565 = vdwg.mxu0
    %v1566 = vxor.u32 %v1563, 2147483648
    %v1567 = vmul.f32 %v1566, 1.442695
    %v1568 = vpow.pop %v1567
    %v1569 = vadd.f32 %v1568, 1.0
    %v1570 = vrcp.pop %v1569
    %v1571 = vmul.f32 1.0, %v1570
    %1572 = vst [vmem:[#allocation3] sm:$0x3] %v1571
    // Predicated region
    $region22: #{tpu_custom_call.1} parent=1 // pred_check
      _
    $region23: #{tpu_custom_call.1} parent=1 // pred_check_branch
      %1574 = sbr.rel (0) target = $region25
    $region24: #{tpu_custom_call.1} parent=1 // pred_region
      %s1576 = ssub.s32 32, 32
      %1577 = vsyncadd [#allocation4], %s1576
      %s1579 = sshll.u32 [#allocation3], 4
      %s1580 = int_to_ptr.vmem [resolvable:$true] %s1579
      %1582 = dma.vmem_to_hbm [thread:$0]  %s1580, 32, %s5, [#allocation4]
    $region25: #{tpu_custom_call.1} parent=1 // pred_fallthru
      _
    // Predicated region
    $region26: #{tpu_custom_call.1} parent=1 // pred_check
      _
    $region27: #{tpu_custom_call.1} parent=1 // pred_check_branch
      %1584 = sbr.rel (0) target = $region29
    $region28: #{tpu_custom_call.1} parent=1 // pred_region
      %1585 = dma.done [#allocation4], 32
    $region29: #{tpu_custom_call.1} parent=1 // pred_fallthru
      _
    %1586 = vsyncpa [#allocation4], 1

</llo_original>
